<compile_context>
chip_gen: v5e
topology: v5e:2x2
jax: 0.10.0
libtpu: 0.0.40
codegen_flags: <defaults>
</compile_context>

<pallas_src>
import jax
import jax.numpy as jnp
from jax.experimental import pallas as pl
from jax.experimental.pallas import tpu as pltpu


def dependent_generator_kernel(
    emb_ref,      # [T*B, 2E]   row block i = [emb(time=i) | emb(time=T-1-i)]
    mask_ref,     # [T*B, 2H]   row block i = [mask(i) bcast H | mask(T-1-i) bcast H], float
    w_enc_ref,    # [2E, 6H]    cols [lam_f|lam_b|w1_f|w1_b|w2_f|w2_b]
    b_enc_ref,    # [1, 6H]     [bhh_f | bhh_b | 0...0]
    whh_ref,      # [2H, 2H]    blockdiag(whh_f, whh_b)
    w_hz_ref,     # [2H, 3Z+1]  rows [h_fwd ; h_bwd], cols [z-cell ih (3Z) | gate (1)]
    b_hz_ref,     # [1, 3Z+1]   [bzhh | 0 | 0 | bg]
    w_zs_ref,     # [Z, Z+1]    [wzhh | wg_s]
    wz_z_ref,     # [1, 3Z]     z column of the z-cell ih weight
    z_out_ref,    # [B, T]
    xp_sc,        # [T*B, 6H]   VMEM scratch (encoder input projections)
    h_sc,         # [T*B, 2H]   VMEM scratch (encoder hidden states, time-aligned)
    hz_sc,        # [T*B, 3Z+1] VMEM scratch (h-dependent z-loop projections)
):
    f32 = jnp.float32
    B, T = z_out_ref.shape
    H2 = whh_ref.shape[0]          # 2H
    H = H2 // 2
    Z = w_zs_ref.shape[0]

    def rcnn_step(xp, ulh, c1, c2, hs, keep_new=None):
        # Lei et al. bigram RCNN cell; the hh-bias is already folded into xp's lambda block.
        wl = xp[:, 0:hs]
        w1 = xp[:, hs:2 * hs]
        w2 = xp[:, 2 * hs:3 * hs]
        lam = jax.nn.sigmoid(wl + ulh)
        if keep_new is not None:
            # mask == 0  ->  lam = 1 keeps (c1, c2) exactly, and since h == tanh(c2)
            # holds by induction it also keeps h: one select instead of three.
            lam = jnp.where(keep_new, lam, 1.0)
        c1n = lam * c1 + (1.0 - lam) * w1
        c2n = lam * c2 + (1.0 - lam) * (c1 + w2)
        return jnp.tanh(c2n), c1n, c2n

    # ---- time-invariant input projection for BOTH directions in one matmul,
    #      written to VMEM so the per-step access below is a plain load ----
    xp_sc[...] = (jnp.dot(emb_ref[...], w_enc_ref[...], preferred_element_type=f32)
                  + b_enc_ref[...])                                        # [T*B, 6H]

    whh = whh_ref[...]                                                     # [2H, 2H]
    zero_h = jnp.zeros((B, H2), f32)
    h, c1, c2 = zero_h, zero_h, zero_h

    # ---- fused fwd+bwd encoder recurrence: 1 dot + 1 sigmoid + 1 tanh per step ----
    # (T is small; fully unrolled with static indices. TODO(synk): switch to
    #  lax.fori_loop with a scratch-backed carry if T grows large.)
    for i in range(T):
        r0 = i * B
        xp = xp_sc[r0:r0 + B, :]                                           # [B, 6H] load
        m = mask_ref[r0:r0 + B, :] > 0.0                                   # [B, 2H]
        # TODO(synk): for K = 2H <= 32 an unrolled VPU broadcast-multiply tree may
        #             beat the MXU round trip on v6e/v7x; measure per chip.
        ulh = jnp.dot(h, whh, preferred_element_type=f32)                  # [B, 2H]
        h, c1, c2 = rcnn_step(xp, ulh, c1, c2, H2, keep_new=m)
        # fwd half is time i, bwd half is time T-1-i: store aligned by time
        # (offset-preserving masked stores; the vst slot is otherwise idle here).
        h_sc[r0:r0 + B, 0:H] = h[:, 0:H]
        rb = (T - 1 - i) * B
        h_sc[rb:rb + B, H:H2] = h[:, H:H2]

    # ---- batched h-dependent projections for the z loop (z-cell ih h-term +
    #      gate h-term, biases folded in), written to VMEM scratch ----
    hz_sc[...] = (jnp.dot(h_sc[...], w_hz_ref[...], preferred_element_type=f32)
                  + b_hz_ref[...])                                         # [T*B, 3Z+1]

    w_zs = w_zs_ref[...]       # [Z, Z+1]
    wz_z = wz_z_ref[...]       # [1, 3Z]
    zero_z = jnp.zeros((B, Z), f32)
    zh, zc1, zc2 = zero_z, zero_z, zero_z

    # ---- dependent z loop: one tiny fused dot on the carried state per step ----
    for t in range(T):
        r0 = t * B
        pre = hz_sc[r0:r0 + B, :]                                          # [B, 3Z+1] load
        d = jnp.dot(zh, w_zs, preferred_element_type=f32)                  # [B, Z+1] = [zh@wzhh | zh@wg_s]
        logits = pre[:, 3 * Z:3 * Z + 1] + d[:, Z:Z + 1]                   # [B, 1]
        z_t = (logits >= 0.0).astype(f32)                                  # sigmoid(l) >= 0.5  <=>  l >= 0
        # masked per-step store of the output column (mask(t) = first fwd column
        # of the fused mask for row block t).
        z_out_ref[:, t:t + 1] = z_t * mask_ref[r0:r0 + B, 0:1]
        xp = pre[:, 0:3 * Z] + z_t * wz_z                                  # [B, 3Z]
        zh, zc1, zc2 = rcnn_step(xp, d[:, 0:Z], zc1, zc2, Z)


def _pack_params(params):
    """Fuse / concatenate weights so the kernel runs one projection per stage."""
    f32 = jnp.float32
    E = params["wih_f"].shape[0]
    H = params["whh_f"].shape[0]
    Z = params["wzhh"].shape[0]
    zeh = jnp.zeros((E, H), f32)
    zhh = jnp.zeros((H, H), f32)
    wf, wb = params["wih_f"], params["wih_b"]
    # fused encoder ih projection: rows [emb_fwd ; emb_bwd], cols [lf|lb|w1f|w1b|w2f|w2b]
    w_enc = jnp.concatenate([
        jnp.concatenate([wf[:, 0:H], zeh, wf[:, H:2 * H], zeh, wf[:, 2 * H:3 * H], zeh], axis=1),
        jnp.concatenate([zeh, wb[:, 0:H], zeh, wb[:, H:2 * H], zeh, wb[:, 2 * H:3 * H]], axis=1),
    ], axis=0)                                                                        # [2E, 6H]
    b_enc = jnp.concatenate([params["bhh_f"], params["bhh_b"],
                             jnp.zeros((1, 4 * H), f32)], axis=1)                     # [1, 6H]
    whh_block = jnp.concatenate([
        jnp.concatenate([params["whh_f"], zhh], axis=1),
        jnp.concatenate([zhh, params["whh_b"]], axis=1),
    ], axis=0)                                                                        # [2H, 2H]
    w_hz = jnp.concatenate([
        jnp.concatenate([params["wzih_hf"], params["wg_hf"]], axis=1),
        jnp.concatenate([params["wzih_hb"], params["wg_hb"]], axis=1),
    ], axis=0)                                                                        # [2H, 3Z+1]
    b_hz = jnp.concatenate([params["bzhh"], jnp.zeros((1, 2 * Z), f32),
                            params["bg"]], axis=1)                                    # [1, 3Z+1]
    w_zs = jnp.concatenate([params["wzhh"], params["wg_s"]], axis=1)                  # [Z, Z+1]
    return w_enc, b_enc, whh_block, w_hz, b_hz, w_zs


def dependent_generator_forward(x, mask, params):
    """x: [B, T] int32 token ids, mask: [B, T] bool. Returns z: [B, T] float32 (eval, num_samples=1)."""
    B, T = x.shape
    f32 = jnp.float32
    H = params["whh_f"].shape[0]
    Z = params["wzhh"].shape[0]

    emb = params["embed"][x].astype(f32)                         # [B, T, E]  (Dropout = identity in eval)
    emb_tb = jnp.transpose(emb, (1, 0, 2))                       # [T, B, E]  time-major
    # Fused layout: row block i carries the fwd step (time i) and the bwd step (time T-1-i).
    emb_fused = jnp.concatenate([emb_tb, emb_tb[::-1]], axis=-1).reshape(T * B, -1)   # [T*B, 2E]
    maskf_tb = jnp.transpose(mask.astype(f32), (1, 0))           # [T, B]
    mask_fused = jnp.concatenate([
        jnp.broadcast_to(maskf_tb[:, :, None], (T, B, H)),
        jnp.broadcast_to(maskf_tb[::-1][:, :, None], (T, B, H)),
    ], axis=-1).reshape(T * B, 2 * H)                            # [T*B, 2H]

    w_enc, b_enc, whh_block, w_hz, b_hz, w_zs = _pack_params(params)

    args = (emb_fused, mask_fused, w_enc, b_enc, whh_block, w_hz, b_hz, w_zs,
            params["wzih_z"])
    vmem = pl.BlockSpec(memory_space=pltpu.MemorySpace.VMEM)
    # NOTE: gridless on purpose — the recurrence is serial-latency-bound, and a batch
    # grid only pays off on multi-TensorCore chips (v7x) once B*num_samples is large
    # enough to split without re-running the full serial chain per chunk (on the
    # single-TC v5e/v6e a batch grid would multiply the serial work).
    z = pl.pallas_call(
        dependent_generator_kernel,
        out_shape=jax.ShapeDtypeStruct((B, T), f32),
        in_specs=[vmem] * len(args),
        out_specs=vmem,
        scratch_shapes=[
            pltpu.VMEM((T * B, 6 * H), f32),          # xp_sc
            pltpu.VMEM((T * B, 2 * H), f32),          # h_sc
            pltpu.VMEM((T * B, 3 * Z + 1), f32),      # hz_sc
        ],
        compiler_params=pltpu.CompilerParams(vmem_limit_bytes=32 * 1024 * 1024),
    )(*args)
    return z                                                      # [B, T]


def init_params(key, vocab=50, emb_size=32, hidden_size=16, z_rnn_size=8):
    """Deterministic synthetic parameters (weights stored pre-transposed as [in, out])."""
    E, H, Z = emb_size, hidden_size, z_rnn_size
    ks = jax.random.split(key, 16)

    def w(k, shape, scale=0.1):
        return (scale * jax.random.normal(k, shape)).astype(jnp.float32)

    return {
        "embed": w(ks[0], (vocab, E)),
        # encoder fwd / bwd RCNN cells: ih Linear(E, 3H, bias=False), hh Linear(H, H, bias=True)
        "wih_f": w(ks[1], (E, 3 * H)), "whh_f": w(ks[2], (H, H)), "bhh_f": w(ks[3], (1, H)),
        "wih_b": w(ks[4], (E, 3 * H)), "whh_b": w(ks[5], (H, H)), "bhh_b": w(ks[6], (1, H)),
        # z_cell: RCNNCell(2H + 1, Z); ih Linear(2H+1, 3Z, bias=False) split into h_fwd / h_bwd / z rows
        "wzih_hf": w(ks[7], (H, 3 * Z)), "wzih_hb": w(ks[8], (H, 3 * Z)), "wzih_z": w(ks[9], (1, 3 * Z)),
        "wzhh": w(ks[10], (Z, Z)), "bzhh": w(ks[11], (1, Z)),
        # z_layer: BernoulliGate = Linear(2H + Z, 1, bias=True), split the same way
        "wg_hf": w(ks[12], (H, 1)), "wg_hb": w(ks[13], (H, 1)), "wg_s": w(ks[14], (Z, 1)),
        "bg": w(ks[15], (1, 1)),
    }


def reference_forward(x, mask, params):
    """Pure-JAX reference mirroring the module math (for a sanity check)."""
    B, T = x.shape
    emb = params["embed"][x].astype(jnp.float32)
    maskf = mask.astype(jnp.float32)[:, :, None]
    H = params["whh_f"].shape[0]
    Z = params["wzhh"].shape[0]
    hi = jax.lax.Precision.HIGHEST

    def rcnn(xp, h, c1, c2, whh, bhh, hs):
        wl, w1, w2 = xp[:, :hs], xp[:, hs:2 * hs], xp[:, 2 * hs:]
        ulh = jnp.dot(h, whh, precision=hi) + bhh
        lam = jax.nn.sigmoid(wl + ulh)
        c1n = lam * c1 + (1.0 - lam) * w1
        c2n = lam * c2 + (1.0 - lam) * (c1 + w2)
        return jnp.tanh(c2n), c1n, c2n

    hF = c1F = c2F = jnp.zeros((B, H), jnp.float32)
    h_fwd = []
    for t in range(T):
        xp = jnp.dot(emb[:, t], params["wih_f"], precision=hi)
        hn, c1n, c2n = rcnn(xp, hF, c1F, c2F, params["whh_f"], params["bhh_f"], H)
        m = maskf[:, t]
        hF = jnp.where(m > 0, hn, hF)
        c1F = jnp.where(m > 0, c1n, c1F)
        c2F = jnp.where(m > 0, c2n, c2F)
        h_fwd.append(hF)

    hB = c1B = c2B = jnp.zeros((B, H), jnp.float32)
    h_bwd = [None] * T
    for i in range(T):
        t = T - 1 - i
        xp = jnp.dot(emb[:, t], params["wih_b"], precision=hi)
        hn, c1n, c2n = rcnn(xp, hB, c1B, c2B, params["whh_b"], params["bhh_b"], H)
        m = maskf[:, t]
        hB = jnp.where(m > 0, hn, hB)
        c1B = jnp.where(m > 0, c1n, c1B)
        c2B = jnp.where(m > 0, c2n, c2B)
        h_bwd[t] = hB

    zh = zc1 = zc2 = jnp.zeros((B, Z), jnp.float32)
    zs = []
    for t in range(T):
        hf, hb = h_fwd[t], h_bwd[t]
        logits = (jnp.dot(hf, params["wg_hf"], precision=hi)
                  + jnp.dot(hb, params["wg_hb"], precision=hi)
                  + jnp.dot(zh, params["wg_s"], precision=hi)
                  + params["bg"])
        z_t = (logits >= 0.0).astype(jnp.float32)
        zs.append(jnp.where(maskf[:, t] > 0, z_t, 0.0))
        xp = (jnp.dot(hf, params["wzih_hf"], precision=hi)
              + jnp.dot(hb, params["wzih_hb"], precision=hi)
              + z_t * params["wzih_z"])
        zh, zc1, zc2 = rcnn(xp, zh, zc1, zc2, params["wzhh"], params["bzhh"], Z)
    return jnp.stack(zs, axis=1)[:, :, 0]


if __name__ == "__main__":
    key = jax.random.PRNGKey(0)
    kp, kx = jax.random.split(key)
    params = init_params(kp)

    B, T, V = 2, 8, 50
    x = jax.random.randint(kx, (B, T), 0, V)
    lengths = jnp.array([8, 5], dtype=jnp.int32)
    mask = jnp.arange(T)[None, :] < lengths[:, None]      # [B, T] bool, right-padded

    z = dependent_generator_forward(x, mask, params)
    z = jax.block_until_ready(z)

    z_ref = reference_forward(x, mask, params)
    assert z.shape == (B, T)
    assert bool(jnp.all((z == 0.0) | (z == 1.0)))
    assert bool(jnp.all(jnp.where(mask, True, z == 0.0)))
    assert bool(jnp.allclose(z, z_ref)), (z, z_ref)
    print("KERNEL_OK")
</pallas_src>

<mosaic_0001>
module attributes {stable_mosaic.version = 11 : i64} {
  func.func @dependent_generator_kernel(%arg0: memref<16x64xf32, #tpu.memory_space<vmem>>, %arg1: memref<16x32xf32, #tpu.memory_space<vmem>>, %arg2: memref<64x96xf32, #tpu.memory_space<vmem>>, %arg3: memref<1x96xf32, #tpu.memory_space<vmem>>, %arg4: memref<32x32xf32, #tpu.memory_space<vmem>>, %arg5: memref<32x25xf32, #tpu.memory_space<vmem>>, %arg6: memref<1x25xf32, #tpu.memory_space<vmem>>, %arg7: memref<8x9xf32, #tpu.memory_space<vmem>>, %arg8: memref<1x24xf32, #tpu.memory_space<vmem>>, %arg9: memref<2x8xf32, #tpu.memory_space<vmem>>, %arg10: memref<16x96xf32, #tpu.memory_space<vmem>>, %arg11: memref<16x32xf32, #tpu.memory_space<vmem>>, %arg12: memref<16x25xf32, #tpu.memory_space<vmem>>) attributes {dimension_semantics = [], scalar_prefetch = 0 : i64, scratch_operands = 3 : i64, tpu.core_type = #tpu.core_type<tc>} {
    %c0 = arith.constant 0 : index
    %c0_0 = arith.constant 0 : index
    %0 = vector.load %arg0[%c0, %c0_0] : memref<16x64xf32, #tpu.memory_space<vmem>>, vector<16x64xf32>
    %c0_1 = arith.constant 0 : index
    %c0_2 = arith.constant 0 : index
    %1 = vector.load %arg2[%c0_1, %c0_2] : memref<64x96xf32, #tpu.memory_space<vmem>>, vector<64x96xf32>
    %cst = arith.constant dense<0.000000e+00> : vector<16x96xf32>
    %2 = tpu.matmul %0, %1, %cst {dimension_numbers = #tpu.dot_dimension_numbers<[1], [0], [0], [1], [0, 0, 1, 1], [], []>} : vector<16x64xf32>, vector<64x96xf32>, vector<16x96xf32> -> vector<16x96xf32>
    %c0_3 = arith.constant 0 : index
    %c0_4 = arith.constant 0 : index
    %3 = vector.load %arg3[%c0_3, %c0_4] : memref<1x96xf32, #tpu.memory_space<vmem>>, vector<1x96xf32>
    %4 = vector.broadcast %3 : vector<1x96xf32> to vector<16x96xf32>
    %5 = arith.addf %2, %4 : vector<16x96xf32>
    %c0_5 = arith.constant 0 : index
    %c0_6 = arith.constant 0 : index
    %6 = vector.load %arg10[%c0_5, %c0_6] : memref<16x96xf32, #tpu.memory_space<vmem>>, vector<16x96xf32>
    tpu.vector_store %arg10[%c0_5, %c0_6], %5 {strides = array<i32>} : memref<16x96xf32, #tpu.memory_space<vmem>>, vector<16x96xf32>,
    %c0_7 = arith.constant 0 : index
    %c0_8 = arith.constant 0 : index
    %7 = vector.load %arg4[%c0_7, %c0_8] : memref<32x32xf32, #tpu.memory_space<vmem>>, vector<32x32xf32>
    %cst_9 = arith.constant 0.000000e+00 : f32
    %8 = vector.broadcast %cst_9 : f32 to vector<2x32xf32>
    %c0_10 = arith.constant 0 : index
    %c0_11 = arith.constant 0 : index
    %9 = vector.load %arg10[%c0_10, %c0_11] : memref<16x96xf32, #tpu.memory_space<vmem>>, vector<2x96xf32>
    %c0_12 = arith.constant 0 : index
    %c0_13 = arith.constant 0 : index
    %10 = vector.load %arg1[%c0_12, %c0_13] : memref<16x32xf32, #tpu.memory_space<vmem>>, vector<2x32xf32>
    %cst_14 = arith.constant 0.000000e+00 : f32
    %11 = vector.broadcast %cst_14 : f32 to vector<2x32xf32>
    %12 = arith.cmpf ogt, %10, %11 : vector<2x32xf32>
    %cst_15 = arith.constant dense<0.000000e+00> : vector<2x32xf32>
    %13 = tpu.matmul %8, %7, %cst_15 {dimension_numbers = #tpu.dot_dimension_numbers<[1], [0], [0], [1], [0, 0, 1, 1], [], []>} : vector<2x32xf32>, vector<32x32xf32>, vector<2x32xf32> -> vector<2x32xf32>
    %14 = vector.extract_strided_slice %9 {offsets = [0, 0], sizes = [2, 32], strides = [1, 1]} : vector<2x96xf32> to vector<2x32xf32>
    %15 = vector.extract_strided_slice %9 {offsets = [0, 32], sizes = [2, 32], strides = [1, 1]} : vector<2x96xf32> to vector<2x32xf32>
    %16 = vector.extract_strided_slice %9 {offsets = [0, 64], sizes = [2, 32], strides = [1, 1]} : vector<2x96xf32> to vector<2x32xf32>
    %17 = arith.addf %14, %13 : vector<2x32xf32>
    %18 = arith.negf %17 : vector<2x32xf32>
    %19 = math.exp %18 : vector<2x32xf32>
    %cst_16 = arith.constant 1.000000e+00 : f32
    %20 = vector.broadcast %cst_16 : f32 to vector<2x32xf32>
    %21 = arith.addf %20, %19 : vector<2x32xf32>
    %22 = arith.divf %20, %21 : vector<2x32xf32>
    %cst_17 = arith.constant 1.000000e+00 : f32
    %23 = vector.broadcast %cst_17 : f32 to vector<2x32xf32>
    %24 = arith.select %12, %22, %23 : vector<2x32xi1>, vector<2x32xf32>
    %25 = arith.mulf %24, %8 : vector<2x32xf32>
    %cst_18 = arith.constant 1.000000e+00 : f32
    %26 = vector.broadcast %cst_18 : f32 to vector<2x32xf32>
    %27 = arith.subf %26, %24 : vector<2x32xf32>
    %28 = arith.mulf %27, %15 : vector<2x32xf32>
    %29 = arith.addf %25, %28 : vector<2x32xf32>
    %30 = arith.mulf %24, %8 : vector<2x32xf32>
    %cst_19 = arith.constant 1.000000e+00 : f32
    %31 = vector.broadcast %cst_19 : f32 to vector<2x32xf32>
    %32 = arith.subf %31, %24 : vector<2x32xf32>
    %33 = arith.addf %8, %16 : vector<2x32xf32>
    %34 = arith.mulf %32, %33 : vector<2x32xf32>
    %35 = arith.addf %30, %34 : vector<2x32xf32>
    %36 = math.tanh %35 : vector<2x32xf32>
    %37 = vector.extract_strided_slice %36 {offsets = [0, 0], sizes = [2, 16], strides = [1, 1]} : vector<2x32xf32> to vector<2x16xf32>
    %c0_20 = arith.constant 0 : index
    %c0_21 = arith.constant 0 : index
    %38 = vector.load %arg11[%c0_20, %c0_21] : memref<16x32xf32, #tpu.memory_space<vmem>>, vector<2x16xf32>
    tpu.vector_store %arg11[%c0_20, %c0_21], %37 {strides = array<i32>} : memref<16x32xf32, #tpu.memory_space<vmem>>, vector<2x16xf32>,
    %39 = vector.extract_strided_slice %36 {offsets = [0, 16], sizes = [2, 16], strides = [1, 1]} : vector<2x32xf32> to vector<2x16xf32>
    %c14 = arith.constant 14 : index
    %c16 = arith.constant 16 : index
    %40 = vector.load %arg11[%c14, %c16] : memref<16x32xf32, #tpu.memory_space<vmem>>, vector<2x16xf32>
    tpu.vector_store %arg11[%c14, %c16], %39 {strides = array<i32>} : memref<16x32xf32, #tpu.memory_space<vmem>>, vector<2x16xf32>,
    %c2 = arith.constant 2 : index
    %c0_22 = arith.constant 0 : index
    %41 = vector.load %arg10[%c2, %c0_22] : memref<16x96xf32, #tpu.memory_space<vmem>>, vector<2x96xf32>
    %c2_23 = arith.constant 2 : index
    %c0_24 = arith.constant 0 : index
    %42 = vector.load %arg1[%c2_23, %c0_24] : memref<16x32xf32, #tpu.memory_space<vmem>>, vector<2x32xf32>
    %cst_25 = arith.constant 0.000000e+00 : f32
    %43 = vector.broadcast %cst_25 : f32 to vector<2x32xf32>
    %44 = arith.cmpf ogt, %42, %43 : vector<2x32xf32>
    %cst_26 = arith.constant dense<0.000000e+00> : vector<2x32xf32>
    %45 = tpu.matmul %36, %7, %cst_26 {dimension_numbers = #tpu.dot_dimension_numbers<[1], [0], [0], [1], [0, 0, 1, 1], [], []>} : vector<2x32xf32>, vector<32x32xf32>, vector<2x32xf32> -> vector<2x32xf32>
    %46 = vector.extract_strided_slice %41 {offsets = [0, 0], sizes = [2, 32], strides = [1, 1]} : vector<2x96xf32> to vector<2x32xf32>
    %47 = vector.extract_strided_slice %41 {offsets = [0, 32], sizes = [2, 32], strides = [1, 1]} : vector<2x96xf32> to vector<2x32xf32>
    %48 = vector.extract_strided_slice %41 {offsets = [0, 64], sizes = [2, 32], strides = [1, 1]} : vector<2x96xf32> to vector<2x32xf32>
    %49 = arith.addf %46, %45 : vector<2x32xf32>
    %50 = arith.negf %49 : vector<2x32xf32>
    %51 = math.exp %50 : vector<2x32xf32>
    %cst_27 = arith.constant 1.000000e+00 : f32
    %52 = vector.broadcast %cst_27 : f32 to vector<2x32xf32>
    %53 = arith.addf %52, %51 : vector<2x32xf32>
    %54 = arith.divf %52, %53 : vector<2x32xf32>
    %cst_28 = arith.constant 1.000000e+00 : f32
    %55 = vector.broadcast %cst_28 : f32 to vector<2x32xf32>
    %56 = arith.select %44, %54, %55 : vector<2x32xi1>, vector<2x32xf32>
    %57 = arith.mulf %56, %29 : vector<2x32xf32>
    %cst_29 = arith.constant 1.000000e+00 : f32
    %58 = vector.broadcast %cst_29 : f32 to vector<2x32xf32>
    %59 = arith.subf %58, %56 : vector<2x32xf32>
    %60 = arith.mulf %59, %47 : vector<2x32xf32>
    %61 = arith.addf %57, %60 : vector<2x32xf32>
    %62 = arith.mulf %56, %35 : vector<2x32xf32>
    %cst_30 = arith.constant 1.000000e+00 : f32
    %63 = vector.broadcast %cst_30 : f32 to vector<2x32xf32>
    %64 = arith.subf %63, %56 : vector<2x32xf32>
    %65 = arith.addf %29, %48 : vector<2x32xf32>
    %66 = arith.mulf %64, %65 : vector<2x32xf32>
    %67 = arith.addf %62, %66 : vector<2x32xf32>
    %68 = math.tanh %67 : vector<2x32xf32>
    %69 = vector.extract_strided_slice %68 {offsets = [0, 0], sizes = [2, 16], strides = [1, 1]} : vector<2x32xf32> to vector<2x16xf32>
    %c2_31 = arith.constant 2 : index
    %c0_32 = arith.constant 0 : index
    %70 = vector.load %arg11[%c2_31, %c0_32] : memref<16x32xf32, #tpu.memory_space<vmem>>, vector<2x16xf32>
    tpu.vector_store %arg11[%c2_31, %c0_32], %69 {strides = array<i32>} : memref<16x32xf32, #tpu.memory_space<vmem>>, vector<2x16xf32>,
    %71 = vector.extract_strided_slice %68 {offsets = [0, 16], sizes = [2, 16], strides = [1, 1]} : vector<2x32xf32> to vector<2x16xf32>
    %c12 = arith.constant 12 : index
    %c16_33 = arith.constant 16 : index
    %72 = vector.load %arg11[%c12, %c16_33] : memref<16x32xf32, #tpu.memory_space<vmem>>, vector<2x16xf32>
    tpu.vector_store %arg11[%c12, %c16_33], %71 {strides = array<i32>} : memref<16x32xf32, #tpu.memory_space<vmem>>, vector<2x16xf32>,
    %c4 = arith.constant 4 : index
    %c0_34 = arith.constant 0 : index
    %73 = vector.load %arg10[%c4, %c0_34] : memref<16x96xf32, #tpu.memory_space<vmem>>, vector<2x96xf32>
    %c4_35 = arith.constant 4 : index
    %c0_36 = arith.constant 0 : index
    %74 = vector.load %arg1[%c4_35, %c0_36] : memref<16x32xf32, #tpu.memory_space<vmem>>, vector<2x32xf32>
    %cst_37 = arith.constant 0.000000e+00 : f32
    %75 = vector.broadcast %cst_37 : f32 to vector<2x32xf32>
    %76 = arith.cmpf ogt, %74, %75 : vector<2x32xf32>
    %cst_38 = arith.constant dense<0.000000e+00> : vector<2x32xf32>
    %77 = tpu.matmul %68, %7, %cst_38 {dimension_numbers = #tpu.dot_dimension_numbers<[1], [0], [0], [1], [0, 0, 1, 1], [], []>} : vector<2x32xf32>, vector<32x32xf32>, vector<2x32xf32> -> vector<2x32xf32>
    %78 = vector.extract_strided_slice %73 {offsets = [0, 0], sizes = [2, 32], strides = [1, 1]} : vector<2x96xf32> to vector<2x32xf32>
    %79 = vector.extract_strided_slice %73 {offsets = [0, 32], sizes = [2, 32], strides = [1, 1]} : vector<2x96xf32> to vector<2x32xf32>
    %80 = vector.extract_strided_slice %73 {offsets = [0, 64], sizes = [2, 32], strides = [1, 1]} : vector<2x96xf32> to vector<2x32xf32>
    %81 = arith.addf %78, %77 : vector<2x32xf32>
    %82 = arith.negf %81 : vector<2x32xf32>
    %83 = math.exp %82 : vector<2x32xf32>
    %cst_39 = arith.constant 1.000000e+00 : f32
    %84 = vector.broadcast %cst_39 : f32 to vector<2x32xf32>
    %85 = arith.addf %84, %83 : vector<2x32xf32>
    %86 = arith.divf %84, %85 : vector<2x32xf32>
    %cst_40 = arith.constant 1.000000e+00 : f32
    %87 = vector.broadcast %cst_40 : f32 to vector<2x32xf32>
    %88 = arith.select %76, %86, %87 : vector<2x32xi1>, vector<2x32xf32>
    %89 = arith.mulf %88, %61 : vector<2x32xf32>
    %cst_41 = arith.constant 1.000000e+00 : f32
    %90 = vector.broadcast %cst_41 : f32 to vector<2x32xf32>
    %91 = arith.subf %90, %88 : vector<2x32xf32>
    %92 = arith.mulf %91, %79 : vector<2x32xf32>
    %93 = arith.addf %89, %92 : vector<2x32xf32>
    %94 = arith.mulf %88, %67 : vector<2x32xf32>
    %cst_42 = arith.constant 1.000000e+00 : f32
    %95 = vector.broadcast %cst_42 : f32 to vector<2x32xf32>
    %96 = arith.subf %95, %88 : vector<2x32xf32>
    %97 = arith.addf %61, %80 : vector<2x32xf32>
    %98 = arith.mulf %96, %97 : vector<2x32xf32>
    %99 = arith.addf %94, %98 : vector<2x32xf32>
    %100 = math.tanh %99 : vector<2x32xf32>
    %101 = vector.extract_strided_slice %100 {offsets = [0, 0], sizes = [2, 16], strides = [1, 1]} : vector<2x32xf32> to vector<2x16xf32>
    %c4_43 = arith.constant 4 : index
    %c0_44 = arith.constant 0 : index
    %102 = vector.load %arg11[%c4_43, %c0_44] : memref<16x32xf32, #tpu.memory_space<vmem>>, vector<2x16xf32>
    tpu.vector_store %arg11[%c4_43, %c0_44], %101 {strides = array<i32>} : memref<16x32xf32, #tpu.memory_space<vmem>>, vector<2x16xf32>,
    %103 = vector.extract_strided_slice %100 {offsets = [0, 16], sizes = [2, 16], strides = [1, 1]} : vector<2x32xf32> to vector<2x16xf32>
    %c10 = arith.constant 10 : index
    %c16_45 = arith.constant 16 : index
    %104 = vector.load %arg11[%c10, %c16_45] : memref<16x32xf32, #tpu.memory_space<vmem>>, vector<2x16xf32>
    tpu.vector_store %arg11[%c10, %c16_45], %103 {strides = array<i32>} : memref<16x32xf32, #tpu.memory_space<vmem>>, vector<2x16xf32>,
    %c6 = arith.constant 6 : index
    %c0_46 = arith.constant 0 : index
    %105 = vector.load %arg10[%c6, %c0_46] : memref<16x96xf32, #tpu.memory_space<vmem>>, vector<2x96xf32>
    %c6_47 = arith.constant 6 : index
    %c0_48 = arith.constant 0 : index
    %106 = vector.load %arg1[%c6_47, %c0_48] : memref<16x32xf32, #tpu.memory_space<vmem>>, vector<2x32xf32>
    %cst_49 = arith.constant 0.000000e+00 : f32
    %107 = vector.broadcast %cst_49 : f32 to vector<2x32xf32>
    %108 = arith.cmpf ogt, %106, %107 : vector<2x32xf32>
    %cst_50 = arith.constant dense<0.000000e+00> : vector<2x32xf32>
    %109 = tpu.matmul %100, %7, %cst_50 {dimension_numbers = #tpu.dot_dimension_numbers<[1], [0], [0], [1], [0, 0, 1, 1], [], []>} : vector<2x32xf32>, vector<32x32xf32>, vector<2x32xf32> -> vector<2x32xf32>
    %110 = vector.extract_strided_slice %105 {offsets = [0, 0], sizes = [2, 32], strides = [1, 1]} : vector<2x96xf32> to vector<2x32xf32>
    %111 = vector.extract_strided_slice %105 {offsets = [0, 32], sizes = [2, 32], strides = [1, 1]} : vector<2x96xf32> to vector<2x32xf32>
    %112 = vector.extract_strided_slice %105 {offsets = [0, 64], sizes = [2, 32], strides = [1, 1]} : vector<2x96xf32> to vector<2x32xf32>
    %113 = arith.addf %110, %109 : vector<2x32xf32>
    %114 = arith.negf %113 : vector<2x32xf32>
    %115 = math.exp %114 : vector<2x32xf32>
    %cst_51 = arith.constant 1.000000e+00 : f32
    %116 = vector.broadcast %cst_51 : f32 to vector<2x32xf32>
    %117 = arith.addf %116, %115 : vector<2x32xf32>
    %118 = arith.divf %116, %117 : vector<2x32xf32>
    %cst_52 = arith.constant 1.000000e+00 : f32
    %119 = vector.broadcast %cst_52 : f32 to vector<2x32xf32>
    %120 = arith.select %108, %118, %119 : vector<2x32xi1>, vector<2x32xf32>
    %121 = arith.mulf %120, %93 : vector<2x32xf32>
    %cst_53 = arith.constant 1.000000e+00 : f32
    %122 = vector.broadcast %cst_53 : f32 to vector<2x32xf32>
    %123 = arith.subf %122, %120 : vector<2x32xf32>
    %124 = arith.mulf %123, %111 : vector<2x32xf32>
    %125 = arith.addf %121, %124 : vector<2x32xf32>
    %126 = arith.mulf %120, %99 : vector<2x32xf32>
    %cst_54 = arith.constant 1.000000e+00 : f32
    %127 = vector.broadcast %cst_54 : f32 to vector<2x32xf32>
    %128 = arith.subf %127, %120 : vector<2x32xf32>
    %129 = arith.addf %93, %112 : vector<2x32xf32>
    %130 = arith.mulf %128, %129 : vector<2x32xf32>
    %131 = arith.addf %126, %130 : vector<2x32xf32>
    %132 = math.tanh %131 : vector<2x32xf32>
    %133 = vector.extract_strided_slice %132 {offsets = [0, 0], sizes = [2, 16], strides = [1, 1]} : vector<2x32xf32> to vector<2x16xf32>
    %c6_55 = arith.constant 6 : index
    %c0_56 = arith.constant 0 : index
    %134 = vector.load %arg11[%c6_55, %c0_56] : memref<16x32xf32, #tpu.memory_space<vmem>>, vector<2x16xf32>
    tpu.vector_store %arg11[%c6_55, %c0_56], %133 {strides = array<i32>} : memref<16x32xf32, #tpu.memory_space<vmem>>, vector<2x16xf32>,
    %135 = vector.extract_strided_slice %132 {offsets = [0, 16], sizes = [2, 16], strides = [1, 1]} : vector<2x32xf32> to vector<2x16xf32>
    %c8 = arith.constant 8 : index
    %c16_57 = arith.constant 16 : index
    %136 = vector.load %arg11[%c8, %c16_57] : memref<16x32xf32, #tpu.memory_space<vmem>>, vector<2x16xf32>
    tpu.vector_store %arg11[%c8, %c16_57], %135 {strides = array<i32>} : memref<16x32xf32, #tpu.memory_space<vmem>>, vector<2x16xf32>,
    %c8_58 = arith.constant 8 : index
    %c0_59 = arith.constant 0 : index
    %137 = vector.load %arg10[%c8_58, %c0_59] : memref<16x96xf32, #tpu.memory_space<vmem>>, vector<2x96xf32>
    %c8_60 = arith.constant 8 : index
    %c0_61 = arith.constant 0 : index
    %138 = vector.load %arg1[%c8_60, %c0_61] : memref<16x32xf32, #tpu.memory_space<vmem>>, vector<2x32xf32>
    %cst_62 = arith.constant 0.000000e+00 : f32
    %139 = vector.broadcast %cst_62 : f32 to vector<2x32xf32>
    %140 = arith.cmpf ogt, %138, %139 : vector<2x32xf32>
    %cst_63 = arith.constant dense<0.000000e+00> : vector<2x32xf32>
    %141 = tpu.matmul %132, %7, %cst_63 {dimension_numbers = #tpu.dot_dimension_numbers<[1], [0], [0], [1], [0, 0, 1, 1], [], []>} : vector<2x32xf32>, vector<32x32xf32>, vector<2x32xf32> -> vector<2x32xf32>
    %142 = vector.extract_strided_slice %137 {offsets = [0, 0], sizes = [2, 32], strides = [1, 1]} : vector<2x96xf32> to vector<2x32xf32>
    %143 = vector.extract_strided_slice %137 {offsets = [0, 32], sizes = [2, 32], strides = [1, 1]} : vector<2x96xf32> to vector<2x32xf32>
    %144 = vector.extract_strided_slice %137 {offsets = [0, 64], sizes = [2, 32], strides = [1, 1]} : vector<2x96xf32> to vector<2x32xf32>
    %145 = arith.addf %142, %141 : vector<2x32xf32>
    %146 = arith.negf %145 : vector<2x32xf32>
    %147 = math.exp %146 : vector<2x32xf32>
    %cst_64 = arith.constant 1.000000e+00 : f32
    %148 = vector.broadcast %cst_64 : f32 to vector<2x32xf32>
    %149 = arith.addf %148, %147 : vector<2x32xf32>
    %150 = arith.divf %148, %149 : vector<2x32xf32>
    %cst_65 = arith.constant 1.000000e+00 : f32
    %151 = vector.broadcast %cst_65 : f32 to vector<2x32xf32>
    %152 = arith.select %140, %150, %151 : vector<2x32xi1>, vector<2x32xf32>
    %153 = arith.mulf %152, %125 : vector<2x32xf32>
    %cst_66 = arith.constant 1.000000e+00 : f32
    %154 = vector.broadcast %cst_66 : f32 to vector<2x32xf32>
    %155 = arith.subf %154, %152 : vector<2x32xf32>
    %156 = arith.mulf %155, %143 : vector<2x32xf32>
    %157 = arith.addf %153, %156 : vector<2x32xf32>
    %158 = arith.mulf %152, %131 : vector<2x32xf32>
    %cst_67 = arith.constant 1.000000e+00 : f32
    %159 = vector.broadcast %cst_67 : f32 to vector<2x32xf32>
    %160 = arith.subf %159, %152 : vector<2x32xf32>
    %161 = arith.addf %125, %144 : vector<2x32xf32>
    %162 = arith.mulf %160, %161 : vector<2x32xf32>
    %163 = arith.addf %158, %162 : vector<2x32xf32>
    %164 = math.tanh %163 : vector<2x32xf32>
    %165 = vector.extract_strided_slice %164 {offsets = [0, 0], sizes = [2, 16], strides = [1, 1]} : vector<2x32xf32> to vector<2x16xf32>
    %c8_68 = arith.constant 8 : index
    %c0_69 = arith.constant 0 : index
    %166 = vector.load %arg11[%c8_68, %c0_69] : memref<16x32xf32, #tpu.memory_space<vmem>>, vector<2x16xf32>
    tpu.vector_store %arg11[%c8_68, %c0_69], %165 {strides = array<i32>} : memref<16x32xf32, #tpu.memory_space<vmem>>, vector<2x16xf32>,
    %167 = vector.extract_strided_slice %164 {offsets = [0, 16], sizes = [2, 16], strides = [1, 1]} : vector<2x32xf32> to vector<2x16xf32>
    %c6_70 = arith.constant 6 : index
    %c16_71 = arith.constant 16 : index
    %168 = vector.load %arg11[%c6_70, %c16_71] : memref<16x32xf32, #tpu.memory_space<vmem>>, vector<2x16xf32>
    tpu.vector_store %arg11[%c6_70, %c16_71], %167 {strides = array<i32>} : memref<16x32xf32, #tpu.memory_space<vmem>>, vector<2x16xf32>,
    %c10_72 = arith.constant 10 : index
    %c0_73 = arith.constant 0 : index
    %169 = vector.load %arg10[%c10_72, %c0_73] : memref<16x96xf32, #tpu.memory_space<vmem>>, vector<2x96xf32>
    %c10_74 = arith.constant 10 : index
    %c0_75 = arith.constant 0 : index
    %170 = vector.load %arg1[%c10_74, %c0_75] : memref<16x32xf32, #tpu.memory_space<vmem>>, vector<2x32xf32>
    %cst_76 = arith.constant 0.000000e+00 : f32
    %171 = vector.broadcast %cst_76 : f32 to vector<2x32xf32>
    %172 = arith.cmpf ogt, %170, %171 : vector<2x32xf32>
    %cst_77 = arith.constant dense<0.000000e+00> : vector<2x32xf32>
    %173 = tpu.matmul %164, %7, %cst_77 {dimension_numbers = #tpu.dot_dimension_numbers<[1], [0], [0], [1], [0, 0, 1, 1], [], []>} : vector<2x32xf32>, vector<32x32xf32>, vector<2x32xf32> -> vector<2x32xf32>
    %174 = vector.extract_strided_slice %169 {offsets = [0, 0], sizes = [2, 32], strides = [1, 1]} : vector<2x96xf32> to vector<2x32xf32>
    %175 = vector.extract_strided_slice %169 {offsets = [0, 32], sizes = [2, 32], strides = [1, 1]} : vector<2x96xf32> to vector<2x32xf32>
    %176 = vector.extract_strided_slice %169 {offsets = [0, 64], sizes = [2, 32], strides = [1, 1]} : vector<2x96xf32> to vector<2x32xf32>
    %177 = arith.addf %174, %173 : vector<2x32xf32>
    %178 = arith.negf %177 : vector<2x32xf32>
    %179 = math.exp %178 : vector<2x32xf32>
    %cst_78 = arith.constant 1.000000e+00 : f32
    %180 = vector.broadcast %cst_78 : f32 to vector<2x32xf32>
    %181 = arith.addf %180, %179 : vector<2x32xf32>
    %182 = arith.divf %180, %181 : vector<2x32xf32>
    %cst_79 = arith.constant 1.000000e+00 : f32
    %183 = vector.broadcast %cst_79 : f32 to vector<2x32xf32>
    %184 = arith.select %172, %182, %183 : vector<2x32xi1>, vector<2x32xf32>
    %185 = arith.mulf %184, %157 : vector<2x32xf32>
    %cst_80 = arith.constant 1.000000e+00 : f32
    %186 = vector.broadcast %cst_80 : f32 to vector<2x32xf32>
    %187 = arith.subf %186, %184 : vector<2x32xf32>
    %188 = arith.mulf %187, %175 : vector<2x32xf32>
    %189 = arith.addf %185, %188 : vector<2x32xf32>
    %190 = arith.mulf %184, %163 : vector<2x32xf32>
    %cst_81 = arith.constant 1.000000e+00 : f32
    %191 = vector.broadcast %cst_81 : f32 to vector<2x32xf32>
    %192 = arith.subf %191, %184 : vector<2x32xf32>
    %193 = arith.addf %157, %176 : vector<2x32xf32>
    %194 = arith.mulf %192, %193 : vector<2x32xf32>
    %195 = arith.addf %190, %194 : vector<2x32xf32>
    %196 = math.tanh %195 : vector<2x32xf32>
    %197 = vector.extract_strided_slice %196 {offsets = [0, 0], sizes = [2, 16], strides = [1, 1]} : vector<2x32xf32> to vector<2x16xf32>
    %c10_82 = arith.constant 10 : index
    %c0_83 = arith.constant 0 : index
    %198 = vector.load %arg11[%c10_82, %c0_83] : memref<16x32xf32, #tpu.memory_space<vmem>>, vector<2x16xf32>
    tpu.vector_store %arg11[%c10_82, %c0_83], %197 {strides = array<i32>} : memref<16x32xf32, #tpu.memory_space<vmem>>, vector<2x16xf32>,
    %199 = vector.extract_strided_slice %196 {offsets = [0, 16], sizes = [2, 16], strides = [1, 1]} : vector<2x32xf32> to vector<2x16xf32>
    %c4_84 = arith.constant 4 : index
    %c16_85 = arith.constant 16 : index
    %200 = vector.load %arg11[%c4_84, %c16_85] : memref<16x32xf32, #tpu.memory_space<vmem>>, vector<2x16xf32>
    tpu.vector_store %arg11[%c4_84, %c16_85], %199 {strides = array<i32>} : memref<16x32xf32, #tpu.memory_space<vmem>>, vector<2x16xf32>,
    %c12_86 = arith.constant 12 : index
    %c0_87 = arith.constant 0 : index
    %201 = vector.load %arg10[%c12_86, %c0_87] : memref<16x96xf32, #tpu.memory_space<vmem>>, vector<2x96xf32>
    %c12_88 = arith.constant 12 : index
    %c0_89 = arith.constant 0 : index
    %202 = vector.load %arg1[%c12_88, %c0_89] : memref<16x32xf32, #tpu.memory_space<vmem>>, vector<2x32xf32>
    %cst_90 = arith.constant 0.000000e+00 : f32
    %203 = vector.broadcast %cst_90 : f32 to vector<2x32xf32>
    %204 = arith.cmpf ogt, %202, %203 : vector<2x32xf32>
    %cst_91 = arith.constant dense<0.000000e+00> : vector<2x32xf32>
    %205 = tpu.matmul %196, %7, %cst_91 {dimension_numbers = #tpu.dot_dimension_numbers<[1], [0], [0], [1], [0, 0, 1, 1], [], []>} : vector<2x32xf32>, vector<32x32xf32>, vector<2x32xf32> -> vector<2x32xf32>
    %206 = vector.extract_strided_slice %201 {offsets = [0, 0], sizes = [2, 32], strides = [1, 1]} : vector<2x96xf32> to vector<2x32xf32>
    %207 = vector.extract_strided_slice %201 {offsets = [0, 32], sizes = [2, 32], strides = [1, 1]} : vector<2x96xf32> to vector<2x32xf32>
    %208 = vector.extract_strided_slice %201 {offsets = [0, 64], sizes = [2, 32], strides = [1, 1]} : vector<2x96xf32> to vector<2x32xf32>
    %209 = arith.addf %206, %205 : vector<2x32xf32>
    %210 = arith.negf %209 : vector<2x32xf32>
    %211 = math.exp %210 : vector<2x32xf32>
    %cst_92 = arith.constant 1.000000e+00 : f32
    %212 = vector.broadcast %cst_92 : f32 to vector<2x32xf32>
    %213 = arith.addf %212, %211 : vector<2x32xf32>
    %214 = arith.divf %212, %213 : vector<2x32xf32>
    %cst_93 = arith.constant 1.000000e+00 : f32
    %215 = vector.broadcast %cst_93 : f32 to vector<2x32xf32>
    %216 = arith.select %204, %214, %215 : vector<2x32xi1>, vector<2x32xf32>
    %217 = arith.mulf %216, %189 : vector<2x32xf32>
    %cst_94 = arith.constant 1.000000e+00 : f32
    %218 = vector.broadcast %cst_94 : f32 to vector<2x32xf32>
    %219 = arith.subf %218, %216 : vector<2x32xf32>
    %220 = arith.mulf %219, %207 : vector<2x32xf32>
    %221 = arith.addf %217, %220 : vector<2x32xf32>
    %222 = arith.mulf %216, %195 : vector<2x32xf32>
    %cst_95 = arith.constant 1.000000e+00 : f32
    %223 = vector.broadcast %cst_95 : f32 to vector<2x32xf32>
    %224 = arith.subf %223, %216 : vector<2x32xf32>
    %225 = arith.addf %189, %208 : vector<2x32xf32>
    %226 = arith.mulf %224, %225 : vector<2x32xf32>
    %227 = arith.addf %222, %226 : vector<2x32xf32>
    %228 = math.tanh %227 : vector<2x32xf32>
    %229 = vector.extract_strided_slice %228 {offsets = [0, 0], sizes = [2, 16], strides = [1, 1]} : vector<2x32xf32> to vector<2x16xf32>
    %c12_96 = arith.constant 12 : index
    %c0_97 = arith.constant 0 : index
    %230 = vector.load %arg11[%c12_96, %c0_97] : memref<16x32xf32, #tpu.memory_space<vmem>>, vector<2x16xf32>
    tpu.vector_store %arg11[%c12_96, %c0_97], %229 {strides = array<i32>} : memref<16x32xf32, #tpu.memory_space<vmem>>, vector<2x16xf32>,
    %231 = vector.extract_strided_slice %228 {offsets = [0, 16], sizes = [2, 16], strides = [1, 1]} : vector<2x32xf32> to vector<2x16xf32>
    %c2_98 = arith.constant 2 : index
    %c16_99 = arith.constant 16 : index
    %232 = vector.load %arg11[%c2_98, %c16_99] : memref<16x32xf32, #tpu.memory_space<vmem>>, vector<2x16xf32>
    tpu.vector_store %arg11[%c2_98, %c16_99], %231 {strides = array<i32>} : memref<16x32xf32, #tpu.memory_space<vmem>>, vector<2x16xf32>,
    %c14_100 = arith.constant 14 : index
    %c0_101 = arith.constant 0 : index
    %233 = vector.load %arg10[%c14_100, %c0_101] : memref<16x96xf32, #tpu.memory_space<vmem>>, vector<2x96xf32>
    %c14_102 = arith.constant 14 : index
    %c0_103 = arith.constant 0 : index
    %234 = vector.load %arg1[%c14_102, %c0_103] : memref<16x32xf32, #tpu.memory_space<vmem>>, vector<2x32xf32>
    %cst_104 = arith.constant 0.000000e+00 : f32
    %235 = vector.broadcast %cst_104 : f32 to vector<2x32xf32>
    %236 = arith.cmpf ogt, %234, %235 : vector<2x32xf32>
    %cst_105 = arith.constant dense<0.000000e+00> : vector<2x32xf32>
    %237 = tpu.matmul %228, %7, %cst_105 {dimension_numbers = #tpu.dot_dimension_numbers<[1], [0], [0], [1], [0, 0, 1, 1], [], []>} : vector<2x32xf32>, vector<32x32xf32>, vector<2x32xf32> -> vector<2x32xf32>
    %238 = vector.extract_strided_slice %233 {offsets = [0, 0], sizes = [2, 32], strides = [1, 1]} : vector<2x96xf32> to vector<2x32xf32>
    %239 = vector.extract_strided_slice %233 {offsets = [0, 64], sizes = [2, 32], strides = [1, 1]} : vector<2x96xf32> to vector<2x32xf32>
    %240 = arith.addf %238, %237 : vector<2x32xf32>
    %241 = arith.negf %240 : vector<2x32xf32>
    %242 = math.exp %241 : vector<2x32xf32>
    %cst_106 = arith.constant 1.000000e+00 : f32
    %243 = vector.broadcast %cst_106 : f32 to vector<2x32xf32>
    %244 = arith.addf %243, %242 : vector<2x32xf32>
    %245 = arith.divf %243, %244 : vector<2x32xf32>
    %cst_107 = arith.constant 1.000000e+00 : f32
    %246 = vector.broadcast %cst_107 : f32 to vector<2x32xf32>
    %247 = arith.select %236, %245, %246 : vector<2x32xi1>, vector<2x32xf32>
    %248 = arith.mulf %247, %227 : vector<2x32xf32>
    %cst_108 = arith.constant 1.000000e+00 : f32
    %249 = vector.broadcast %cst_108 : f32 to vector<2x32xf32>
    %250 = arith.subf %249, %247 : vector<2x32xf32>
    %251 = arith.addf %221, %239 : vector<2x32xf32>
    %252 = arith.mulf %250, %251 : vector<2x32xf32>
    %253 = arith.addf %248, %252 : vector<2x32xf32>
    %254 = math.tanh %253 : vector<2x32xf32>
    %255 = vector.extract_strided_slice %254 {offsets = [0, 0], sizes = [2, 16], strides = [1, 1]} : vector<2x32xf32> to vector<2x16xf32>
    %c14_109 = arith.constant 14 : index
    %c0_110 = arith.constant 0 : index
    %256 = vector.load %arg11[%c14_109, %c0_110] : memref<16x32xf32, #tpu.memory_space<vmem>>, vector<2x16xf32>
    tpu.vector_store %arg11[%c14_109, %c0_110], %255 {strides = array<i32>} : memref<16x32xf32, #tpu.memory_space<vmem>>, vector<2x16xf32>,
    %257 = vector.extract_strided_slice %254 {offsets = [0, 16], sizes = [2, 16], strides = [1, 1]} : vector<2x32xf32> to vector<2x16xf32>
    %c0_111 = arith.constant 0 : index
    %c16_112 = arith.constant 16 : index
    %258 = vector.load %arg11[%c0_111, %c16_112] : memref<16x32xf32, #tpu.memory_space<vmem>>, vector<2x16xf32>
    tpu.vector_store %arg11[%c0_111, %c16_112], %257 {strides = array<i32>} : memref<16x32xf32, #tpu.memory_space<vmem>>, vector<2x16xf32>,
    %c0_113 = arith.constant 0 : index
    %c0_114 = arith.constant 0 : index
    %259 = vector.load %arg11[%c0_113, %c0_114] : memref<16x32xf32, #tpu.memory_space<vmem>>, vector<16x32xf32>
    %c0_115 = arith.constant 0 : index
    %c0_116 = arith.constant 0 : index
    %260 = vector.load %arg5[%c0_115, %c0_116] : memref<32x25xf32, #tpu.memory_space<vmem>>, vector<32x25xf32>
    %cst_117 = arith.constant dense<0.000000e+00> : vector<16x25xf32>
    %261 = tpu.matmul %259, %260, %cst_117 {dimension_numbers = #tpu.dot_dimension_numbers<[1], [0], [0], [1], [0, 0, 1, 1], [], []>} : vector<16x32xf32>, vector<32x25xf32>, vector<16x25xf32> -> vector<16x25xf32>
    %c0_118 = arith.constant 0 : index
    %c0_119 = arith.constant 0 : index
    %262 = vector.load %arg6[%c0_118, %c0_119] : memref<1x25xf32, #tpu.memory_space<vmem>>, vector<1x25xf32>
    %263 = vector.broadcast %262 : vector<1x25xf32> to vector<16x25xf32>
    %264 = arith.addf %261, %263 : vector<16x25xf32>
    %c0_120 = arith.constant 0 : index
    %c0_121 = arith.constant 0 : index
    %265 = vector.load %arg12[%c0_120, %c0_121] : memref<16x25xf32, #tpu.memory_space<vmem>>, vector<16x25xf32>
    tpu.vector_store %arg12[%c0_120, %c0_121], %264 {strides = array<i32>} : memref<16x25xf32, #tpu.memory_space<vmem>>, vector<16x25xf32>,
    %c0_122 = arith.constant 0 : index
    %c0_123 = arith.constant 0 : index
    %266 = vector.load %arg7[%c0_122, %c0_123] : memref<8x9xf32, #tpu.memory_space<vmem>>, vector<8x9xf32>
    %c0_124 = arith.constant 0 : index
    %c0_125 = arith.constant 0 : index
    %267 = vector.load %arg8[%c0_124, %c0_125] : memref<1x24xf32, #tpu.memory_space<vmem>>, vector<1x24xf32>
    %cst_126 = arith.constant 0.000000e+00 : f32
    %268 = vector.broadcast %cst_126 : f32 to vector<2x8xf32>
    %c0_127 = arith.constant 0 : index
    %c0_128 = arith.constant 0 : index
    %269 = vector.load %arg12[%c0_127, %c0_128] : memref<16x25xf32, #tpu.memory_space<vmem>>, vector<2x25xf32>
    %cst_129 = arith.constant dense<0.000000e+00> : vector<2x9xf32>
    %270 = tpu.matmul %268, %266, %cst_129 {dimension_numbers = #tpu.dot_dimension_numbers<[1], [0], [0], [1], [0, 0, 1, 1], [], []>} : vector<2x8xf32>, vector<8x9xf32>, vector<2x9xf32> -> vector<2x9xf32>
    %271 = vector.extract_strided_slice %269 {offsets = [0, 24], sizes = [2, 1], strides = [1, 1]} : vector<2x25xf32> to vector<2x1xf32>
    %272 = vector.extract_strided_slice %270 {offsets = [0, 8], sizes = [2, 1], strides = [1, 1]} : vector<2x9xf32> to vector<2x1xf32>
    %273 = arith.addf %271, %272 : vector<2x1xf32>
    %cst_130 = arith.constant 0.000000e+00 : f32
    %274 = vector.broadcast %cst_130 : f32 to vector<2x1xf32>
    %275 = arith.cmpf oge, %273, %274 : vector<2x1xf32>
    %276 = arith.extui %275 : vector<2x1xi1> to vector<2x1xi32>
    %277 = arith.sitofp %276 : vector<2x1xi32> to vector<2x1xf32>
    %c0_131 = arith.constant 0 : index
    %c0_132 = arith.constant 0 : index
    %278 = vector.load %arg1[%c0_131, %c0_132] : memref<16x32xf32, #tpu.memory_space<vmem>>, vector<2x1xf32>
    %279 = arith.mulf %277, %278 : vector<2x1xf32>
    %c0_133 = arith.constant 0 : index
    %c0_134 = arith.constant 0 : index
    %280 = vector.load %arg9[%c0_133, %c0_134] : memref<2x8xf32, #tpu.memory_space<vmem>>, vector<2x1xf32>
    tpu.vector_store %arg9[%c0_133, %c0_134], %279 {strides = array<i32>} : memref<2x8xf32, #tpu.memory_space<vmem>>, vector<2x1xf32>,
    %281 = vector.extract_strided_slice %269 {offsets = [0, 0], sizes = [2, 24], strides = [1, 1]} : vector<2x25xf32> to vector<2x24xf32>
    %282 = vector.broadcast %277 : vector<2x1xf32> to vector<2x24xf32>
    %283 = vector.broadcast %267 : vector<1x24xf32> to vector<2x24xf32>
    %284 = arith.mulf %282, %283 : vector<2x24xf32>
    %285 = arith.addf %281, %284 : vector<2x24xf32>
    %286 = vector.extract_strided_slice %270 {offsets = [0, 0], sizes = [2, 8], strides = [1, 1]} : vector<2x9xf32> to vector<2x8xf32>
    %287 = vector.extract_strided_slice %285 {offsets = [0, 0], sizes = [2, 8], strides = [1, 1]} : vector<2x24xf32> to vector<2x8xf32>
    %288 = vector.extract_strided_slice %285 {offsets = [0, 8], sizes = [2, 8], strides = [1, 1]} : vector<2x24xf32> to vector<2x8xf32>
    %289 = vector.extract_strided_slice %285 {offsets = [0, 16], sizes = [2, 8], strides = [1, 1]} : vector<2x24xf32> to vector<2x8xf32>
    %290 = arith.addf %287, %286 : vector<2x8xf32>
    %291 = arith.negf %290 : vector<2x8xf32>
    %292 = math.exp %291 : vector<2x8xf32>
    %cst_135 = arith.constant 1.000000e+00 : f32
    %293 = vector.broadcast %cst_135 : f32 to vector<2x8xf32>
    %294 = arith.addf %293, %292 : vector<2x8xf32>
    %295 = arith.divf %293, %294 : vector<2x8xf32>
    %296 = arith.mulf %295, %268 : vector<2x8xf32>
    %cst_136 = arith.constant 1.000000e+00 : f32
    %297 = vector.broadcast %cst_136 : f32 to vector<2x8xf32>
    %298 = arith.subf %297, %295 : vector<2x8xf32>
    %299 = arith.mulf %298, %288 : vector<2x8xf32>
    %300 = arith.addf %296, %299 : vector<2x8xf32>
    %301 = arith.mulf %295, %268 : vector<2x8xf32>
    %cst_137 = arith.constant 1.000000e+00 : f32
    %302 = vector.broadcast %cst_137 : f32 to vector<2x8xf32>
    %303 = arith.subf %302, %295 : vector<2x8xf32>
    %304 = arith.addf %268, %289 : vector<2x8xf32>
    %305 = arith.mulf %303, %304 : vector<2x8xf32>
    %306 = arith.addf %301, %305 : vector<2x8xf32>
    %307 = math.tanh %306 : vector<2x8xf32>
    %c2_138 = arith.constant 2 : index
    %c0_139 = arith.constant 0 : index
    %308 = vector.load %arg12[%c2_138, %c0_139] : memref<16x25xf32, #tpu.memory_space<vmem>>, vector<2x25xf32>
    %cst_140 = arith.constant dense<0.000000e+00> : vector<2x9xf32>
    %309 = tpu.matmul %307, %266, %cst_140 {dimension_numbers = #tpu.dot_dimension_numbers<[1], [0], [0], [1], [0, 0, 1, 1], [], []>} : vector<2x8xf32>, vector<8x9xf32>, vector<2x9xf32> -> vector<2x9xf32>
    %310 = vector.extract_strided_slice %308 {offsets = [0, 24], sizes = [2, 1], strides = [1, 1]} : vector<2x25xf32> to vector<2x1xf32>
    %311 = vector.extract_strided_slice %309 {offsets = [0, 8], sizes = [2, 1], strides = [1, 1]} : vector<2x9xf32> to vector<2x1xf32>
    %312 = arith.addf %310, %311 : vector<2x1xf32>
    %cst_141 = arith.constant 0.000000e+00 : f32
    %313 = vector.broadcast %cst_141 : f32 to vector<2x1xf32>
    %314 = arith.cmpf oge, %312, %313 : vector<2x1xf32>
    %315 = arith.extui %314 : vector<2x1xi1> to vector<2x1xi32>
    %316 = arith.sitofp %315 : vector<2x1xi32> to vector<2x1xf32>
    %c2_142 = arith.constant 2 : index
    %c0_143 = arith.constant 0 : index
    %317 = vector.load %arg1[%c2_142, %c0_143] : memref<16x32xf32, #tpu.memory_space<vmem>>, vector<2x1xf32>
    %318 = arith.mulf %316, %317 : vector<2x1xf32>
    %c0_144 = arith.constant 0 : index
    %c1 = arith.constant 1 : index
    %319 = vector.load %arg9[%c0_144, %c1] : memref<2x8xf32, #tpu.memory_space<vmem>>, vector<2x1xf32>
    tpu.vector_store %arg9[%c0_144, %c1], %318 {strides = array<i32>} : memref<2x8xf32, #tpu.memory_space<vmem>>, vector<2x1xf32>,
    %320 = vector.extract_strided_slice %308 {offsets = [0, 0], sizes = [2, 24], strides = [1, 1]} : vector<2x25xf32> to vector<2x24xf32>
    %321 = vector.broadcast %316 : vector<2x1xf32> to vector<2x24xf32>
    %322 = vector.broadcast %267 : vector<1x24xf32> to vector<2x24xf32>
    %323 = arith.mulf %321, %322 : vector<2x24xf32>
    %324 = arith.addf %320, %323 : vector<2x24xf32>
    %325 = vector.extract_strided_slice %309 {offsets = [0, 0], sizes = [2, 8], strides = [1, 1]} : vector<2x9xf32> to vector<2x8xf32>
    %326 = vector.extract_strided_slice %324 {offsets = [0, 0], sizes = [2, 8], strides = [1, 1]} : vector<2x24xf32> to vector<2x8xf32>
    %327 = vector.extract_strided_slice %324 {offsets = [0, 8], sizes = [2, 8], strides = [1, 1]} : vector<2x24xf32> to vector<2x8xf32>
    %328 = vector.extract_strided_slice %324 {offsets = [0, 16], sizes = [2, 8], strides = [1, 1]} : vector<2x24xf32> to vector<2x8xf32>
    %329 = arith.addf %326, %325 : vector<2x8xf32>
    %330 = arith.negf %329 : vector<2x8xf32>
    %331 = math.exp %330 : vector<2x8xf32>
    %cst_145 = arith.constant 1.000000e+00 : f32
    %332 = vector.broadcast %cst_145 : f32 to vector<2x8xf32>
    %333 = arith.addf %332, %331 : vector<2x8xf32>
    %334 = arith.divf %332, %333 : vector<2x8xf32>
    %335 = arith.mulf %334, %300 : vector<2x8xf32>
    %cst_146 = arith.constant 1.000000e+00 : f32
    %336 = vector.broadcast %cst_146 : f32 to vector<2x8xf32>
    %337 = arith.subf %336, %334 : vector<2x8xf32>
    %338 = arith.mulf %337, %327 : vector<2x8xf32>
    %339 = arith.addf %335, %338 : vector<2x8xf32>
    %340 = arith.mulf %334, %306 : vector<2x8xf32>
    %cst_147 = arith.constant 1.000000e+00 : f32
    %341 = vector.broadcast %cst_147 : f32 to vector<2x8xf32>
    %342 = arith.subf %341, %334 : vector<2x8xf32>
    %343 = arith.addf %300, %328 : vector<2x8xf32>
    %344 = arith.mulf %342, %343 : vector<2x8xf32>
    %345 = arith.addf %340, %344 : vector<2x8xf32>
    %346 = math.tanh %345 : vector<2x8xf32>
    %c4_148 = arith.constant 4 : index
    %c0_149 = arith.constant 0 : index
    %347 = vector.load %arg12[%c4_148, %c0_149] : memref<16x25xf32, #tpu.memory_space<vmem>>, vector<2x25xf32>
    %cst_150 = arith.constant dense<0.000000e+00> : vector<2x9xf32>
    %348 = tpu.matmul %346, %266, %cst_150 {dimension_numbers = #tpu.dot_dimension_numbers<[1], [0], [0], [1], [0, 0, 1, 1], [], []>} : vector<2x8xf32>, vector<8x9xf32>, vector<2x9xf32> -> vector<2x9xf32>
    %349 = vector.extract_strided_slice %347 {offsets = [0, 24], sizes = [2, 1], strides = [1, 1]} : vector<2x25xf32> to vector<2x1xf32>
    %350 = vector.extract_strided_slice %348 {offsets = [0, 8], sizes = [2, 1], strides = [1, 1]} : vector<2x9xf32> to vector<2x1xf32>
    %351 = arith.addf %349, %350 : vector<2x1xf32>
    %cst_151 = arith.constant 0.000000e+00 : f32
    %352 = vector.broadcast %cst_151 : f32 to vector<2x1xf32>
    %353 = arith.cmpf oge, %351, %352 : vector<2x1xf32>
    %354 = arith.extui %353 : vector<2x1xi1> to vector<2x1xi32>
    %355 = arith.sitofp %354 : vector<2x1xi32> to vector<2x1xf32>
    %c4_152 = arith.constant 4 : index
    %c0_153 = arith.constant 0 : index
    %356 = vector.load %arg1[%c4_152, %c0_153] : memref<16x32xf32, #tpu.memory_space<vmem>>, vector<2x1xf32>
    %357 = arith.mulf %355, %356 : vector<2x1xf32>
    %c0_154 = arith.constant 0 : index
    %c2_155 = arith.constant 2 : index
    %358 = vector.load %arg9[%c0_154, %c2_155] : memref<2x8xf32, #tpu.memory_space<vmem>>, vector<2x1xf32>
    tpu.vector_store %arg9[%c0_154, %c2_155], %357 {strides = array<i32>} : memref<2x8xf32, #tpu.memory_space<vmem>>, vector<2x1xf32>,
    %359 = vector.extract_strided_slice %347 {offsets = [0, 0], sizes = [2, 24], strides = [1, 1]} : vector<2x25xf32> to vector<2x24xf32>
    %360 = vector.broadcast %355 : vector<2x1xf32> to vector<2x24xf32>
    %361 = vector.broadcast %267 : vector<1x24xf32> to vector<2x24xf32>
    %362 = arith.mulf %360, %361 : vector<2x24xf32>
    %363 = arith.addf %359, %362 : vector<2x24xf32>
    %364 = vector.extract_strided_slice %348 {offsets = [0, 0], sizes = [2, 8], strides = [1, 1]} : vector<2x9xf32> to vector<2x8xf32>
    %365 = vector.extract_strided_slice %363 {offsets = [0, 0], sizes = [2, 8], strides = [1, 1]} : vector<2x24xf32> to vector<2x8xf32>
    %366 = vector.extract_strided_slice %363 {offsets = [0, 8], sizes = [2, 8], strides = [1, 1]} : vector<2x24xf32> to vector<2x8xf32>
    %367 = vector.extract_strided_slice %363 {offsets = [0, 16], sizes = [2, 8], strides = [1, 1]} : vector<2x24xf32> to vector<2x8xf32>
    %368 = arith.addf %365, %364 : vector<2x8xf32>
    %369 = arith.negf %368 : vector<2x8xf32>
    %370 = math.exp %369 : vector<2x8xf32>
    %cst_156 = arith.constant 1.000000e+00 : f32
    %371 = vector.broadcast %cst_156 : f32 to vector<2x8xf32>
    %372 = arith.addf %371, %370 : vector<2x8xf32>
    %373 = arith.divf %371, %372 : vector<2x8xf32>
    %374 = arith.mulf %373, %339 : vector<2x8xf32>
    %cst_157 = arith.constant 1.000000e+00 : f32
    %375 = vector.broadcast %cst_157 : f32 to vector<2x8xf32>
    %376 = arith.subf %375, %373 : vector<2x8xf32>
    %377 = arith.mulf %376, %366 : vector<2x8xf32>
    %378 = arith.addf %374, %377 : vector<2x8xf32>
    %379 = arith.mulf %373, %345 : vector<2x8xf32>
    %cst_158 = arith.constant 1.000000e+00 : f32
    %380 = vector.broadcast %cst_158 : f32 to vector<2x8xf32>
    %381 = arith.subf %380, %373 : vector<2x8xf32>
    %382 = arith.addf %339, %367 : vector<2x8xf32>
    %383 = arith.mulf %381, %382 : vector<2x8xf32>
    %384 = arith.addf %379, %383 : vector<2x8xf32>
    %385 = math.tanh %384 : vector<2x8xf32>
    %c6_159 = arith.constant 6 : index
    %c0_160 = arith.constant 0 : index
    %386 = vector.load %arg12[%c6_159, %c0_160] : memref<16x25xf32, #tpu.memory_space<vmem>>, vector<2x25xf32>
    %cst_161 = arith.constant dense<0.000000e+00> : vector<2x9xf32>
    %387 = tpu.matmul %385, %266, %cst_161 {dimension_numbers = #tpu.dot_dimension_numbers<[1], [0], [0], [1], [0, 0, 1, 1], [], []>} : vector<2x8xf32>, vector<8x9xf32>, vector<2x9xf32> -> vector<2x9xf32>
    %388 = vector.extract_strided_slice %386 {offsets = [0, 24], sizes = [2, 1], strides = [1, 1]} : vector<2x25xf32> to vector<2x1xf32>
    %389 = vector.extract_strided_slice %387 {offsets = [0, 8], sizes = [2, 1], strides = [1, 1]} : vector<2x9xf32> to vector<2x1xf32>
    %390 = arith.addf %388, %389 : vector<2x1xf32>
    %cst_162 = arith.constant 0.000000e+00 : f32
    %391 = vector.broadcast %cst_162 : f32 to vector<2x1xf32>
    %392 = arith.cmpf oge, %390, %391 : vector<2x1xf32>
    %393 = arith.extui %392 : vector<2x1xi1> to vector<2x1xi32>
    %394 = arith.sitofp %393 : vector<2x1xi32> to vector<2x1xf32>
    %c6_163 = arith.constant 6 : index
    %c0_164 = arith.constant 0 : index
    %395 = vector.load %arg1[%c6_163, %c0_164] : memref<16x32xf32, #tpu.memory_space<vmem>>, vector<2x1xf32>
    %396 = arith.mulf %394, %395 : vector<2x1xf32>
    %c0_165 = arith.constant 0 : index
    %c3 = arith.constant 3 : index
    %397 = vector.load %arg9[%c0_165, %c3] : memref<2x8xf32, #tpu.memory_space<vmem>>, vector<2x1xf32>
    tpu.vector_store %arg9[%c0_165, %c3], %396 {strides = array<i32>} : memref<2x8xf32, #tpu.memory_space<vmem>>, vector<2x1xf32>,
    %398 = vector.extract_strided_slice %386 {offsets = [0, 0], sizes = [2, 24], strides = [1, 1]} : vector<2x25xf32> to vector<2x24xf32>
    %399 = vector.broadcast %394 : vector<2x1xf32> to vector<2x24xf32>
    %400 = vector.broadcast %267 : vector<1x24xf32> to vector<2x24xf32>
    %401 = arith.mulf %399, %400 : vector<2x24xf32>
    %402 = arith.addf %398, %401 : vector<2x24xf32>
    %403 = vector.extract_strided_slice %387 {offsets = [0, 0], sizes = [2, 8], strides = [1, 1]} : vector<2x9xf32> to vector<2x8xf32>
    %404 = vector.extract_strided_slice %402 {offsets = [0, 0], sizes = [2, 8], strides = [1, 1]} : vector<2x24xf32> to vector<2x8xf32>
    %405 = vector.extract_strided_slice %402 {offsets = [0, 8], sizes = [2, 8], strides = [1, 1]} : vector<2x24xf32> to vector<2x8xf32>
    %406 = vector.extract_strided_slice %402 {offsets = [0, 16], sizes = [2, 8], strides = [1, 1]} : vector<2x24xf32> to vector<2x8xf32>
    %407 = arith.addf %404, %403 : vector<2x8xf32>
    %408 = arith.negf %407 : vector<2x8xf32>
    %409 = math.exp %408 : vector<2x8xf32>
    %cst_166 = arith.constant 1.000000e+00 : f32
    %410 = vector.broadcast %cst_166 : f32 to vector<2x8xf32>
    %411 = arith.addf %410, %409 : vector<2x8xf32>
    %412 = arith.divf %410, %411 : vector<2x8xf32>
    %413 = arith.mulf %412, %378 : vector<2x8xf32>
    %cst_167 = arith.constant 1.000000e+00 : f32
    %414 = vector.broadcast %cst_167 : f32 to vector<2x8xf32>
    %415 = arith.subf %414, %412 : vector<2x8xf32>
    %416 = arith.mulf %415, %405 : vector<2x8xf32>
    %417 = arith.addf %413, %416 : vector<2x8xf32>
    %418 = arith.mulf %412, %384 : vector<2x8xf32>
    %cst_168 = arith.constant 1.000000e+00 : f32
    %419 = vector.broadcast %cst_168 : f32 to vector<2x8xf32>
    %420 = arith.subf %419, %412 : vector<2x8xf32>
    %421 = arith.addf %378, %406 : vector<2x8xf32>
    %422 = arith.mulf %420, %421 : vector<2x8xf32>
    %423 = arith.addf %418, %422 : vector<2x8xf32>
    %424 = math.tanh %423 : vector<2x8xf32>
    %c8_169 = arith.constant 8 : index
    %c0_170 = arith.constant 0 : index
    %425 = vector.load %arg12[%c8_169, %c0_170] : memref<16x25xf32, #tpu.memory_space<vmem>>, vector<2x25xf32>
    %cst_171 = arith.constant dense<0.000000e+00> : vector<2x9xf32>
    %426 = tpu.matmul %424, %266, %cst_171 {dimension_numbers = #tpu.dot_dimension_numbers<[1], [0], [0], [1], [0, 0, 1, 1], [], []>} : vector<2x8xf32>, vector<8x9xf32>, vector<2x9xf32> -> vector<2x9xf32>
    %427 = vector.extract_strided_slice %425 {offsets = [0, 24], sizes = [2, 1], strides = [1, 1]} : vector<2x25xf32> to vector<2x1xf32>
    %428 = vector.extract_strided_slice %426 {offsets = [0, 8], sizes = [2, 1], strides = [1, 1]} : vector<2x9xf32> to vector<2x1xf32>
    %429 = arith.addf %427, %428 : vector<2x1xf32>
    %cst_172 = arith.constant 0.000000e+00 : f32
    %430 = vector.broadcast %cst_172 : f32 to vector<2x1xf32>
    %431 = arith.cmpf oge, %429, %430 : vector<2x1xf32>
    %432 = arith.extui %431 : vector<2x1xi1> to vector<2x1xi32>
    %433 = arith.sitofp %432 : vector<2x1xi32> to vector<2x1xf32>
    %c8_173 = arith.constant 8 : index
    %c0_174 = arith.constant 0 : index
    %434 = vector.load %arg1[%c8_173, %c0_174] : memref<16x32xf32, #tpu.memory_space<vmem>>, vector<2x1xf32>
    %435 = arith.mulf %433, %434 : vector<2x1xf32>
    %c0_175 = arith.constant 0 : index
    %c4_176 = arith.constant 4 : index
    %436 = vector.load %arg9[%c0_175, %c4_176] : memref<2x8xf32, #tpu.memory_space<vmem>>, vector<2x1xf32>
    tpu.vector_store %arg9[%c0_175, %c4_176], %435 {strides = array<i32>} : memref<2x8xf32, #tpu.memory_space<vmem>>, vector<2x1xf32>,
    %437 = vector.extract_strided_slice %425 {offsets = [0, 0], sizes = [2, 24], strides = [1, 1]} : vector<2x25xf32> to vector<2x24xf32>
    %438 = vector.broadcast %433 : vector<2x1xf32> to vector<2x24xf32>
    %439 = vector.broadcast %267 : vector<1x24xf32> to vector<2x24xf32>
    %440 = arith.mulf %438, %439 : vector<2x24xf32>
    %441 = arith.addf %437, %440 : vector<2x24xf32>
    %442 = vector.extract_strided_slice %426 {offsets = [0, 0], sizes = [2, 8], strides = [1, 1]} : vector<2x9xf32> to vector<2x8xf32>
    %443 = vector.extract_strided_slice %441 {offsets = [0, 0], sizes = [2, 8], strides = [1, 1]} : vector<2x24xf32> to vector<2x8xf32>
    %444 = vector.extract_strided_slice %441 {offsets = [0, 8], sizes = [2, 8], strides = [1, 1]} : vector<2x24xf32> to vector<2x8xf32>
    %445 = vector.extract_strided_slice %441 {offsets = [0, 16], sizes = [2, 8], strides = [1, 1]} : vector<2x24xf32> to vector<2x8xf32>
    %446 = arith.addf %443, %442 : vector<2x8xf32>
    %447 = arith.negf %446 : vector<2x8xf32>
    %448 = math.exp %447 : vector<2x8xf32>
    %cst_177 = arith.constant 1.000000e+00 : f32
    %449 = vector.broadcast %cst_177 : f32 to vector<2x8xf32>
    %450 = arith.addf %449, %448 : vector<2x8xf32>
    %451 = arith.divf %449, %450 : vector<2x8xf32>
    %452 = arith.mulf %451, %417 : vector<2x8xf32>
    %cst_178 = arith.constant 1.000000e+00 : f32
    %453 = vector.broadcast %cst_178 : f32 to vector<2x8xf32>
    %454 = arith.subf %453, %451 : vector<2x8xf32>
    %455 = arith.mulf %454, %444 : vector<2x8xf32>
    %456 = arith.addf %452, %455 : vector<2x8xf32>
    %457 = arith.mulf %451, %423 : vector<2x8xf32>
    %cst_179 = arith.constant 1.000000e+00 : f32
    %458 = vector.broadcast %cst_179 : f32 to vector<2x8xf32>
    %459 = arith.subf %458, %451 : vector<2x8xf32>
    %460 = arith.addf %417, %445 : vector<2x8xf32>
    %461 = arith.mulf %459, %460 : vector<2x8xf32>
    %462 = arith.addf %457, %461 : vector<2x8xf32>
    %463 = math.tanh %462 : vector<2x8xf32>
    %c10_180 = arith.constant 10 : index
    %c0_181 = arith.constant 0 : index
    %464 = vector.load %arg12[%c10_180, %c0_181] : memref<16x25xf32, #tpu.memory_space<vmem>>, vector<2x25xf32>
    %cst_182 = arith.constant dense<0.000000e+00> : vector<2x9xf32>
    %465 = tpu.matmul %463, %266, %cst_182 {dimension_numbers = #tpu.dot_dimension_numbers<[1], [0], [0], [1], [0, 0, 1, 1], [], []>} : vector<2x8xf32>, vector<8x9xf32>, vector<2x9xf32> -> vector<2x9xf32>
    %466 = vector.extract_strided_slice %464 {offsets = [0, 24], sizes = [2, 1], strides = [1, 1]} : vector<2x25xf32> to vector<2x1xf32>
    %467 = vector.extract_strided_slice %465 {offsets = [0, 8], sizes = [2, 1], strides = [1, 1]} : vector<2x9xf32> to vector<2x1xf32>
    %468 = arith.addf %466, %467 : vector<2x1xf32>
    %cst_183 = arith.constant 0.000000e+00 : f32
    %469 = vector.broadcast %cst_183 : f32 to vector<2x1xf32>
    %470 = arith.cmpf oge, %468, %469 : vector<2x1xf32>
    %471 = arith.extui %470 : vector<2x1xi1> to vector<2x1xi32>
    %472 = arith.sitofp %471 : vector<2x1xi32> to vector<2x1xf32>
    %c10_184 = arith.constant 10 : index
    %c0_185 = arith.constant 0 : index
    %473 = vector.load %arg1[%c10_184, %c0_185] : memref<16x32xf32, #tpu.memory_space<vmem>>, vector<2x1xf32>
    %474 = arith.mulf %472, %473 : vector<2x1xf32>
    %c0_186 = arith.constant 0 : index
    %c5 = arith.constant 5 : index
    %475 = vector.load %arg9[%c0_186, %c5] : memref<2x8xf32, #tpu.memory_space<vmem>>, vector<2x1xf32>
    tpu.vector_store %arg9[%c0_186, %c5], %474 {strides = array<i32>} : memref<2x8xf32, #tpu.memory_space<vmem>>, vector<2x1xf32>,
    %476 = vector.extract_strided_slice %464 {offsets = [0, 0], sizes = [2, 24], strides = [1, 1]} : vector<2x25xf32> to vector<2x24xf32>
    %477 = vector.broadcast %472 : vector<2x1xf32> to vector<2x24xf32>
    %478 = vector.broadcast %267 : vector<1x24xf32> to vector<2x24xf32>
    %479 = arith.mulf %477, %478 : vector<2x24xf32>
    %480 = arith.addf %476, %479 : vector<2x24xf32>
    %481 = vector.extract_strided_slice %465 {offsets = [0, 0], sizes = [2, 8], strides = [1, 1]} : vector<2x9xf32> to vector<2x8xf32>
    %482 = vector.extract_strided_slice %480 {offsets = [0, 0], sizes = [2, 8], strides = [1, 1]} : vector<2x24xf32> to vector<2x8xf32>
    %483 = vector.extract_strided_slice %480 {offsets = [0, 8], sizes = [2, 8], strides = [1, 1]} : vector<2x24xf32> to vector<2x8xf32>
    %484 = vector.extract_strided_slice %480 {offsets = [0, 16], sizes = [2, 8], strides = [1, 1]} : vector<2x24xf32> to vector<2x8xf32>
    %485 = arith.addf %482, %481 : vector<2x8xf32>
    %486 = arith.negf %485 : vector<2x8xf32>
    %487 = math.exp %486 : vector<2x8xf32>
    %cst_187 = arith.constant 1.000000e+00 : f32
    %488 = vector.broadcast %cst_187 : f32 to vector<2x8xf32>
    %489 = arith.addf %488, %487 : vector<2x8xf32>
    %490 = arith.divf %488, %489 : vector<2x8xf32>
    %491 = arith.mulf %490, %456 : vector<2x8xf32>
    %cst_188 = arith.constant 1.000000e+00 : f32
    %492 = vector.broadcast %cst_188 : f32 to vector<2x8xf32>
    %493 = arith.subf %492, %490 : vector<2x8xf32>
    %494 = arith.mulf %493, %483 : vector<2x8xf32>
    %495 = arith.addf %491, %494 : vector<2x8xf32>
    %496 = arith.mulf %490, %462 : vector<2x8xf32>
    %cst_189 = arith.constant 1.000000e+00 : f32
    %497 = vector.broadcast %cst_189 : f32 to vector<2x8xf32>
    %498 = arith.subf %497, %490 : vector<2x8xf32>
    %499 = arith.addf %456, %484 : vector<2x8xf32>
    %500 = arith.mulf %498, %499 : vector<2x8xf32>
    %501 = arith.addf %496, %500 : vector<2x8xf32>
    %502 = math.tanh %501 : vector<2x8xf32>
    %c12_190 = arith.constant 12 : index
    %c0_191 = arith.constant 0 : index
    %503 = vector.load %arg12[%c12_190, %c0_191] : memref<16x25xf32, #tpu.memory_space<vmem>>, vector<2x25xf32>
    %cst_192 = arith.constant dense<0.000000e+00> : vector<2x9xf32>
    %504 = tpu.matmul %502, %266, %cst_192 {dimension_numbers = #tpu.dot_dimension_numbers<[1], [0], [0], [1], [0, 0, 1, 1], [], []>} : vector<2x8xf32>, vector<8x9xf32>, vector<2x9xf32> -> vector<2x9xf32>
    %505 = vector.extract_strided_slice %503 {offsets = [0, 24], sizes = [2, 1], strides = [1, 1]} : vector<2x25xf32> to vector<2x1xf32>
    %506 = vector.extract_strided_slice %504 {offsets = [0, 8], sizes = [2, 1], strides = [1, 1]} : vector<2x9xf32> to vector<2x1xf32>
    %507 = arith.addf %505, %506 : vector<2x1xf32>
    %cst_193 = arith.constant 0.000000e+00 : f32
    %508 = vector.broadcast %cst_193 : f32 to vector<2x1xf32>
    %509 = arith.cmpf oge, %507, %508 : vector<2x1xf32>
    %510 = arith.extui %509 : vector<2x1xi1> to vector<2x1xi32>
    %511 = arith.sitofp %510 : vector<2x1xi32> to vector<2x1xf32>
    %c12_194 = arith.constant 12 : index
    %c0_195 = arith.constant 0 : index
    %512 = vector.load %arg1[%c12_194, %c0_195] : memref<16x32xf32, #tpu.memory_space<vmem>>, vector<2x1xf32>
    %513 = arith.mulf %511, %512 : vector<2x1xf32>
    %c0_196 = arith.constant 0 : index
    %c6_197 = arith.constant 6 : index
    %514 = vector.load %arg9[%c0_196, %c6_197] : memref<2x8xf32, #tpu.memory_space<vmem>>, vector<2x1xf32>
    tpu.vector_store %arg9[%c0_196, %c6_197], %513 {strides = array<i32>} : memref<2x8xf32, #tpu.memory_space<vmem>>, vector<2x1xf32>,
    %515 = vector.extract_strided_slice %503 {offsets = [0, 0], sizes = [2, 24], strides = [1, 1]} : vector<2x25xf32> to vector<2x24xf32>
    %516 = vector.broadcast %511 : vector<2x1xf32> to vector<2x24xf32>
    %517 = vector.broadcast %267 : vector<1x24xf32> to vector<2x24xf32>
    %518 = arith.mulf %516, %517 : vector<2x24xf32>
    %519 = arith.addf %515, %518 : vector<2x24xf32>
    %520 = vector.extract_strided_slice %504 {offsets = [0, 0], sizes = [2, 8], strides = [1, 1]} : vector<2x9xf32> to vector<2x8xf32>
    %521 = vector.extract_strided_slice %519 {offsets = [0, 0], sizes = [2, 8], strides = [1, 1]} : vector<2x24xf32> to vector<2x8xf32>
    %522 = vector.extract_strided_slice %519 {offsets = [0, 16], sizes = [2, 8], strides = [1, 1]} : vector<2x24xf32> to vector<2x8xf32>
    %523 = arith.addf %521, %520 : vector<2x8xf32>
    %524 = arith.negf %523 : vector<2x8xf32>
    %525 = math.exp %524 : vector<2x8xf32>
    %cst_198 = arith.constant 1.000000e+00 : f32
    %526 = vector.broadcast %cst_198 : f32 to vector<2x8xf32>
    %527 = arith.addf %526, %525 : vector<2x8xf32>
    %528 = arith.divf %526, %527 : vector<2x8xf32>
    %529 = arith.mulf %528, %501 : vector<2x8xf32>
    %cst_199 = arith.constant 1.000000e+00 : f32
    %530 = vector.broadcast %cst_199 : f32 to vector<2x8xf32>
    %531 = arith.subf %530, %528 : vector<2x8xf32>
    %532 = arith.addf %495, %522 : vector<2x8xf32>
    %533 = arith.mulf %531, %532 : vector<2x8xf32>
    %534 = arith.addf %529, %533 : vector<2x8xf32>
    %535 = math.tanh %534 : vector<2x8xf32>
    %c14_200 = arith.constant 14 : index
    %c0_201 = arith.constant 0 : index
    %536 = vector.load %arg12[%c14_200, %c0_201] : memref<16x25xf32, #tpu.memory_space<vmem>>, vector<2x25xf32>
    %cst_202 = arith.constant dense<0.000000e+00> : vector<2x9xf32>
    %537 = tpu.matmul %535, %266, %cst_202 {dimension_numbers = #tpu.dot_dimension_numbers<[1], [0], [0], [1], [0, 0, 1, 1], [], []>} : vector<2x8xf32>, vector<8x9xf32>, vector<2x9xf32> -> vector<2x9xf32>
    %538 = vector.extract_strided_slice %536 {offsets = [0, 24], sizes = [2, 1], strides = [1, 1]} : vector<2x25xf32> to vector<2x1xf32>
    %539 = vector.extract_strided_slice %537 {offsets = [0, 8], sizes = [2, 1], strides = [1, 1]} : vector<2x9xf32> to vector<2x1xf32>
    %540 = arith.addf %538, %539 : vector<2x1xf32>
    %cst_203 = arith.constant 0.000000e+00 : f32
    %541 = vector.broadcast %cst_203 : f32 to vector<2x1xf32>
    %542 = arith.cmpf oge, %540, %541 : vector<2x1xf32>
    %543 = arith.extui %542 : vector<2x1xi1> to vector<2x1xi32>
    %544 = arith.sitofp %543 : vector<2x1xi32> to vector<2x1xf32>
    %c14_204 = arith.constant 14 : index
    %c0_205 = arith.constant 0 : index
    %545 = vector.load %arg1[%c14_204, %c0_205] : memref<16x32xf32, #tpu.memory_space<vmem>>, vector<2x1xf32>
    %546 = arith.mulf %544, %545 : vector<2x1xf32>
    %c0_206 = arith.constant 0 : index
    %c7 = arith.constant 7 : index
    %547 = vector.load %arg9[%c0_206, %c7] : memref<2x8xf32, #tpu.memory_space<vmem>>, vector<2x1xf32>
    tpu.vector_store %arg9[%c0_206, %c7], %546 {strides = array<i32>} : memref<2x8xf32, #tpu.memory_space<vmem>>, vector<2x1xf32>,
    return
  }
}

</mosaic_0001>

<llo_original>
// kernel: tpu_custom_call.1
$region0: #{tpu_custom_call.1}
  #allocation0 [shape = 'u32[]', space=smem, size = 0x4, offset = 0x4, fixed_abs, tag = 'smem constant byte address 0x4 - core index']
  #allocation1 [shape = 'u32[72,128]{1,0:T(1,128)}', space=vmem, size = 0x9000, scoped, tag = 'internal scratch']
  #allocation2 [shape = 'f32[16,96]{1,0:T(8,128)}', space=vmem, size = 0x2000, scoped, tag = 'scratch operand']
  #allocation3 [shape = 'f32[16,32]{1,0:T(8,128)}', space=vmem, size = 0x2000, scoped, tag = 'scratch operand']
  #allocation4 [shape = 'f32[16,25]{1,0:T(8,128)}', space=vmem, size = 0x2000, scoped, tag = 'scratch operand']
  %s0 = inlined_call_operand.hbm [shape: f32[16,64], index: 0, kind: input, shape index: {}]
  %s1 = inlined_call_operand.hbm [shape: f32[16,32], index: 1, kind: input, shape index: {}]
  %s2 = inlined_call_operand.hbm [shape: f32[64,96], index: 2, kind: input, shape index: {}]
  %s3 = inlined_call_operand.vmem [shape: f32[1,96], index: 3, kind: input, shape index: {}]
  %s4 = inlined_call_operand.hbm [shape: f32[32,32], index: 4, kind: input, shape index: {}]
  %s5 = inlined_call_operand.hbm [shape: f32[32,25], index: 5, kind: input, shape index: {}]
  %s6 = inlined_call_operand.vmem [shape: f32[1,25], index: 6, kind: input, shape index: {}]
  %s7 = inlined_call_operand.hbm [shape: f32[8,9], index: 7, kind: input, shape index: {}]
  %s8 = inlined_call_operand.vmem [shape: f32[1,24], index: 8, kind: input, shape index: {}]
  %s9 = inlined_call_operand.hbm [shape: f32[2,8], index: 9, kind: output, shape index: {}]
  %s10 = sld [smem:[#allocation0]]
  $region70: #{tpu_custom_call.1} parent=0
    _
  %s12 = ssub.s32 1, %s10
  %s13 = scalar_select 0, %s12, %s10
  $region1: #{tpu_custom_call.1} parent=0
    #allocation5 [shape = 'u8[8192]{0}', space=vmem, size = 0x2000, scoped, tag = 'input window, operand 0, single buffered']
    #allocation6 [shape = 's32[1]{0}', space=sflag, size = 0x4, scoped, tag = 'scoped memory for tpu_custom_call.1']
    #allocation7 [shape = 's32[1]{0}', space=sflag, size = 0x4, scoped, tag = 'scoped memory for tpu_custom_call.1']
    #allocation8 [shape = 'u8[8192]{0}', space=vmem, size = 0x2000, scoped, tag = 'input window, operand 1, single buffered']
    #allocation9 [shape = 's32[1]{0}', space=sflag, size = 0x4, scoped, tag = 'scoped memory for tpu_custom_call.1']
    #allocation10 [shape = 'u8[32768]{0}', space=vmem, size = 0x8000, scoped, tag = 'input window, operand 2, single buffered']
    #allocation11 [shape = 'u8[16384]{0}', space=vmem, size = 0x4000, scoped, tag = 'input window, operand 4, single buffered']
    #allocation12 [shape = 's32[1]{0}', space=sflag, size = 0x4, scoped, tag = 'scoped memory for tpu_custom_call.1']
    #allocation13 [shape = 'u8[16384]{0}', space=vmem, size = 0x4000, scoped, tag = 'input window, operand 5, single buffered']
    #allocation14 [shape = 'u8[4096]{0}', space=vmem, size = 0x1000, scoped, tag = 'input window, operand 7, single buffered']
    #allocation15 [shape = 's32[1]{0}', space=sflag, size = 0x4, scoped, tag = 'scoped memory for tpu_custom_call.1']
    #allocation16 [shape = 'u8[1024]{0}', space=vmem, size = 0x400, scoped, tag = 'output window, operand 0, single buffered']
    %14 = vsyncpa [#allocation6], 0
    %15 = vsyncpa [#allocation9], 0
    %16 = vsyncpa [#allocation12], 0
    %17 = vsyncpa [#allocation15], 0
    %18 = vsyncpa [#allocation7], 0
    // Predicated region
    $region2: #{tpu_custom_call.1} parent=1 // pred_check
      _
    $region3: #{tpu_custom_call.1} parent=1 // pred_check_branch
      %20 = sbr.rel (0) target = $region5
    $region4: #{tpu_custom_call.1} parent=1 // pred_region
      %22 = vsyncadd [#allocation6], 0
      %s23 = sshll.u32 %s0, 4
      %s24 = int_to_ptr.hbm [resolvable:$true] %s23
      %s25 = sshll.u32 [#allocation5], 4
      %s26 = int_to_ptr.vmem [resolvable:$true] %s25
      %31 = dma.hbm_to_vmem [thread:$0]  %s24, 256, %s26, [#allocation6], 128, 128, 8
    $region5: #{tpu_custom_call.1} parent=1 // pred_fallthru
      _
    // Predicated region
    $region6: #{tpu_custom_call.1} parent=1 // pred_check
      _
    $region7: #{tpu_custom_call.1} parent=1 // pred_check_branch
      %33 = sbr.rel (0) target = $region9
    $region8: #{tpu_custom_call.1} parent=1 // pred_region
      %35 = vsyncadd [#allocation9], 0
      %s36 = sshll.u32 %s1, 4
      %s37 = int_to_ptr.hbm [resolvable:$true] %s36
      %s38 = sshll.u32 [#allocation8], 4
      %s39 = int_to_ptr.vmem [resolvable:$true] %s38
      %44 = dma.hbm_to_vmem [thread:$0]  %s37, 256, %s39, [#allocation9], 128, 128, 8
    $region9: #{tpu_custom_call.1} parent=1 // pred_fallthru
      _
    // Predicated region
    $region10: #{tpu_custom_call.1} parent=1 // pred_check
      _
    $region11: #{tpu_custom_call.1} parent=1 // pred_check_branch
      %46 = sbr.rel (0) target = $region13
    $region12: #{tpu_custom_call.1} parent=1 // pred_region
      %48 = vsyncadd [#allocation9], 0
      %s49 = sshll.u32 %s2, 4
      %s50 = int_to_ptr.hbm [resolvable:$true] %s49
      %s51 = sshll.u32 [#allocation10], 4
      %s52 = int_to_ptr.vmem [resolvable:$true] %s51
      %57 = dma.hbm_to_vmem [thread:$0]  %s50, 1024, %s52, [#allocation9], 128, 128, 8
    $region13: #{tpu_custom_call.1} parent=1 // pred_fallthru
      _
    // Predicated region
    $region14: #{tpu_custom_call.1} parent=1 // pred_check
      _
    $region15: #{tpu_custom_call.1} parent=1 // pred_check_branch
      %59 = sbr.rel (0) target = $region17
    $region16: #{tpu_custom_call.1} parent=1 // pred_region
      _
    $region17: #{tpu_custom_call.1} parent=1 // pred_fallthru
      _
    // Predicated region
    $region18: #{tpu_custom_call.1} parent=1 // pred_check
      _
    $region19: #{tpu_custom_call.1} parent=1 // pred_check_branch
      %61 = sbr.rel (0) target = $region21
    $region20: #{tpu_custom_call.1} parent=1 // pred_region
      %63 = vsyncadd [#allocation12], 0
      %s64 = sshll.u32 %s4, 4
      %s65 = int_to_ptr.hbm [resolvable:$true] %s64
      %s66 = sshll.u32 [#allocation11], 4
      %s67 = int_to_ptr.vmem [resolvable:$true] %s66
      %72 = dma.hbm_to_vmem [thread:$0]  %s65, 512, %s67, [#allocation12], 128, 128, 8
    $region21: #{tpu_custom_call.1} parent=1 // pred_fallthru
      _
    // Predicated region
    $region22: #{tpu_custom_call.1} parent=1 // pred_check
      _
    $region23: #{tpu_custom_call.1} parent=1 // pred_check_branch
      %74 = sbr.rel (0) target = $region25
    $region24: #{tpu_custom_call.1} parent=1 // pred_region
      %76 = vsyncadd [#allocation12], 0
      %s77 = sshll.u32 %s5, 4
      %s78 = int_to_ptr.hbm [resolvable:$true] %s77
      %s79 = sshll.u32 [#allocation13], 4
      %s80 = int_to_ptr.vmem [resolvable:$true] %s79
      %85 = dma.hbm_to_vmem [thread:$0]  %s78, 512, %s80, [#allocation12], 128, 128, 8
    $region25: #{tpu_custom_call.1} parent=1 // pred_fallthru
      _
    // Predicated region
    $region26: #{tpu_custom_call.1} parent=1 // pred_check
      _
    $region27: #{tpu_custom_call.1} parent=1 // pred_check_branch
      %87 = sbr.rel (0) target = $region29
    $region28: #{tpu_custom_call.1} parent=1 // pred_region
      _
    $region29: #{tpu_custom_call.1} parent=1 // pred_fallthru
      _
    // Predicated region
    $region30: #{tpu_custom_call.1} parent=1 // pred_check
      _
    $region31: #{tpu_custom_call.1} parent=1 // pred_check_branch
      %89 = sbr.rel (0) target = $region33
    $region32: #{tpu_custom_call.1} parent=1 // pred_region
      %91 = vsyncadd [#allocation15], 0
      %s93 = sshll.u32 %s7, 4
      %s94 = int_to_ptr.hbm [resolvable:$true] %s93
      %s95 = sshll.u32 [#allocation14], 4
      %s96 = int_to_ptr.vmem [resolvable:$true] %s95
      %98 = dma.hbm_to_vmem [thread:$0]  %s94, 128, %s96, [#allocation15]
    $region33: #{tpu_custom_call.1} parent=1 // pred_fallthru
      _
    // Predicated region
    $region34: #{tpu_custom_call.1} parent=1 // pred_check
      _
    $region35: #{tpu_custom_call.1} parent=1 // pred_check_branch
      %100 = sbr.rel (0) target = $region37
    $region36: #{tpu_custom_call.1} parent=1 // pred_region
      _
    $region37: #{tpu_custom_call.1} parent=1 // pred_fallthru
      _
    // Predicated region
    $region38: #{tpu_custom_call.1} parent=1 // pred_check
      _
    $region39: #{tpu_custom_call.1} parent=1 // pred_check_branch
      %102 = sbr.rel (0) target = $region41
    $region40: #{tpu_custom_call.1} parent=1 // pred_region
      %104 = dma.done [#allocation6], 256
    $region41: #{tpu_custom_call.1} parent=1 // pred_fallthru
      _
    // Predicated region
    $region42: #{tpu_custom_call.1} parent=1 // pred_check
      _
    $region43: #{tpu_custom_call.1} parent=1 // pred_check_branch
      %106 = sbr.rel (0) target = $region45
    $region44: #{tpu_custom_call.1} parent=1 // pred_region
      %108 = dma.done [#allocation9], 256
    $region45: #{tpu_custom_call.1} parent=1 // pred_fallthru
      _
    // Predicated region
    $region46: #{tpu_custom_call.1} parent=1 // pred_check
      _
    $region47: #{tpu_custom_call.1} parent=1 // pred_check_branch
      %110 = sbr.rel (0) target = $region49
    $region48: #{tpu_custom_call.1} parent=1 // pred_region
      %112 = dma.done [#allocation9], 1024
    $region49: #{tpu_custom_call.1} parent=1 // pred_fallthru
      _
    // Predicated region
    $region50: #{tpu_custom_call.1} parent=1 // pred_check
      _
    $region51: #{tpu_custom_call.1} parent=1 // pred_check_branch
      %114 = sbr.rel (0) target = $region53
    $region52: #{tpu_custom_call.1} parent=1 // pred_region
      %116 = dma.done [#allocation12], 512
    $region53: #{tpu_custom_call.1} parent=1 // pred_fallthru
      _
    // Predicated region
    $region54: #{tpu_custom_call.1} parent=1 // pred_check
      _
    $region55: #{tpu_custom_call.1} parent=1 // pred_check_branch
      %118 = sbr.rel (0) target = $region57
    $region56: #{tpu_custom_call.1} parent=1 // pred_region
      %120 = dma.done [#allocation12], 512
    $region57: #{tpu_custom_call.1} parent=1 // pred_fallthru
      _
    // Predicated region
    $region58: #{tpu_custom_call.1} parent=1 // pred_check
      _
    $region59: #{tpu_custom_call.1} parent=1 // pred_check_branch
      %122 = sbr.rel (0) target = $region61
    $region60: #{tpu_custom_call.1} parent=1 // pred_region
      %124 = dma.done [#allocation15], 128
    $region61: #{tpu_custom_call.1} parent=1 // pred_fallthru
      _
    %v125 = vld [vmem:[#allocation5] sm:$0xff]
    %v126 = vld [vmem:[#allocation5 + $0x8] sm:$0xff]
    %v127 = vld [vmem:[#allocation10] sm:$0xff]
    %v128 = vld [vmem:[#allocation10 + $0x8] sm:$0xff]
    %v129 = vld [vmem:[#allocation10 + $0x10] sm:$0xff]
    %v130 = vld [vmem:[#allocation10 + $0x18] sm:$0xff]
    %v131 = vld [vmem:[#allocation10 + $0x20] sm:$0xff]
    %v132 = vld [vmem:[#allocation10 + $0x28] sm:$0xff]
    %v133 = vld [vmem:[#allocation10 + $0x30] sm:$0xff]
    %v134 = vld [vmem:[#allocation10 + $0x38] sm:$0xff]
    %v135 = vld [vmem:[%s3] sm:$0x1]
    %v137 = vperm.slane %v135, 0
    %vm139 = vcmask 523264
    %v141 = vsel %vm139, %v125, 0
    %v144 = vsel %vm139, %v126, 0
    %146 = vmatpush.msra.mxu0 0.0
    %147 = vmatpush.msra.mxu0 0.0
    %148 = vmatpush.msra.mxu0 0.0
    %149 = vmatpush.msra.mxu0 0.0
    %150 = vmatpush.msra.mxu0 0.0
    %151 = vmatpush.msra.mxu0 0.0
    %152 = vmatpush.msra.mxu0 0.0
    %153 = vmatpush.msra.mxu0 0.0
    %154 = vmatpush.msra.mxu0 %v134
    %155 = vmatpush.msra.mxu0 %v133
    %156 = vmatpush.msra.mxu0 %v132
    %157 = vmatpush.msra.mxu0 %v131
    %158 = vmatpush.msra.mxu0 %v130
    %159 = vmatpush.msra.mxu0 %v129
    %160 = vmatpush.msra.mxu0 %v128
    %161 = vmatpush.msra.mxu0 %v127
    %162 = vmatmul.f32.gmra.mxu0 %v141
    %v163 = vpop.f32.mrf.mxu0
    %v164 = vadd.f32 %v137, %v163
    %165 = vmatmul.f32.gmra.mxu0 %v144
    %v166 = vpop.f32.mrf.mxu0
    %v167 = vadd.f32 %v137, %v166
    %168 = vdwg.mxu0
    %vm169 = vcmask 785408
    %170 = vst.msk [vmem:[#allocation2] sm:$0xff] %vm169, %v164
    %171 = vst.msk [vmem:[#allocation2 + $0x8] sm:$0xff] %vm169, %v167
    %v172 = vld [vmem:[#allocation11] sm:$0xff]
    %v173 = vld [vmem:[#allocation11 + $0x8] sm:$0xff]
    %v174 = vld [vmem:[#allocation11 + $0x10] sm:$0xff]
    %v175 = vld [vmem:[#allocation11 + $0x18] sm:$0xff]
    %v176 = vld [vmem:[#allocation2] sm:$0x3]
    %v177 = vld [vmem:[#allocation8] sm:$0x3]
    %vm178 = vcmp.gt.f32.partialorder %v177, 0.0
    %vm179 = vcmask 261120
    %v181 = vsel %vm179, 0.0, 0
    %183 = vmatpush.msra.mxu0 0.0
    %184 = vmatpush.msra.mxu0 0.0
    %185 = vmatpush.msra.mxu0 0.0
    %186 = vmatpush.msra.mxu0 0.0
    %187 = vmatpush.msra.mxu0 0.0
    %188 = vmatpush.msra.mxu0 0.0
    %189 = vmatpush.msra.mxu0 0.0
    %190 = vmatpush.msra.mxu0 0.0
    %191 = vmatpush.msra.mxu0 0.0
    %192 = vmatpush.msra.mxu0 0.0
    %193 = vmatpush.msra.mxu0 0.0
    %194 = vmatpush.msra.mxu0 0.0
    %195 = vmatpush.msra.mxu0 %v175
    %196 = vmatpush.msra.mxu0 %v174
    %197 = vmatpush.msra.mxu0 %v173
    %198 = vmatpush.msra.mxu0 %v172
    %199 = vmatmul.f32.gmra.mxu0 %v181
    %v200 = vpop.f32.mrf.mxu0
    %v201 = vadd.f32 0.0, %v200
    %202 = vdwg.mxu0
    %v203 = vadd.f32 %v176, %v201
    %v204 = vxor.u32 %v203, 2147483648
    %v205 = vmul.f32 %v204, 1.442695
    %v206 = vpow.pop %v205
    %v207 = vadd.f32 %v206, 1.0
    %v208 = vrcp.pop %v207
    %v209 = vmul.f32 %v207, %v208
    %v210 = vsub.f32 1.0, %v209
    %v211 = vmul.f32 %v208, %v210
    %v212 = vadd.f32 %v208, %v211
    %vm213 = vweird.f32 %v207
    %vm214 = vweird.f32 %v208
    %vm215 = vmor %vm213, %vm214
    %v216 = vsel %vm215, %v208, %v212
    %v217 = vand.u32 2147483647, %v207
    %vm218 = vcmp.eq.f32.partialorder %v217, 8.507059e+37
    %v219 = vand.u32 %v207, 2147483648
    %v220 = vor.u32 1.1754944e-38, %v219
    %v221 = vsel %vm218, %v220, %v216
    %v222 = vmul.f32 1.0, %v221
    %v223 = vsel %vm178, %v222, 1.0
    %v224 = vmul.f32 %v223, 0.0
    %v225 = vsub.f32 1.0, %v223
    %227 = vrot.lane.b32.xlu0 %v176, 96
    %v228 = vpop.permute.xlu0 %227
    %v230 = vmul.f32 %v225, %v228
    %v231 = vadd.f32 %v224, %v230
    %v232 = vadd.f32 %v176, 0.0
    %234 = vrot.lane.b32.xlu0 %v232, 64
    %v235 = vpop.permute.xlu0 %234
    %v237 = vmul.f32 %v225, %v235
    %v238 = vadd.f32 %v224, %v237
    %v239 = vtanh.pop %v238
    %vm240 = vcmask 123904
    %241 = vst.msk [vmem:[#allocation3] sm:$0x3] %vm240, %v239
    %vm242 = vcmask 255104
    %243 = vst.msk [vmem:[#allocation3 + $0xe] sm:$0x3] %vm242, %v239
    %v244 = vld [vmem:[#allocation2 + $0x2] sm:$0x3]
    %v245 = vld [vmem:[#allocation8 + $0x2] sm:$0x3]
    %vm246 = vcmp.gt.f32.partialorder %v245, 0.0
    %v248 = vsel %vm179, %v239, 0
    %250 = vmatpush.msra.mxu0 0.0
    %251 = vmatpush.msra.mxu0 0.0
    %252 = vmatpush.msra.mxu0 0.0
    %253 = vmatpush.msra.mxu0 0.0
    %254 = vmatpush.msra.mxu0 0.0
    %255 = vmatpush.msra.mxu0 0.0
    %256 = vmatpush.msra.mxu0 0.0
    %257 = vmatpush.msra.mxu0 0.0
    %258 = vmatpush.msra.mxu0 0.0
    %259 = vmatpush.msra.mxu0 0.0
    %260 = vmatpush.msra.mxu0 0.0
    %261 = vmatpush.msra.mxu0 0.0
    %262 = vmatpush.msra.mxu0 %v175
    %263 = vmatpush.msra.mxu0 %v174
    %264 = vmatpush.msra.mxu0 %v173
    %265 = vmatpush.msra.mxu0 %v172
    %266 = vmatmul.f32.gmra.mxu0 %v248
    %v267 = vpop.f32.mrf.mxu0
    %v268 = vadd.f32 0.0, %v267
    %269 = vdwg.mxu0
    %v270 = vadd.f32 %v244, %v268
    %v271 = vxor.u32 %v270, 2147483648
    %v272 = vmul.f32 %v271, 1.442695
    %v273 = vpow.pop %v272
    %v274 = vadd.f32 %v273, 1.0
    %v275 = vrcp.pop %v274
    %v276 = vmul.f32 %v274, %v275
    %v277 = vsub.f32 1.0, %v276
    %v278 = vmul.f32 %v275, %v277
    %v279 = vadd.f32 %v275, %v278
    %vm280 = vweird.f32 %v274
    %vm281 = vweird.f32 %v275
    %vm282 = vmor %vm280, %vm281
    %v283 = vsel %vm282, %v275, %v279
    %v284 = vand.u32 2147483647, %v274
    %vm285 = vcmp.eq.f32.partialorder %v284, 8.507059e+37
    %v286 = vand.u32 %v274, 2147483648
    %v287 = vor.u32 1.1754944e-38, %v286
    %v288 = vsel %vm285, %v287, %v283
    %v289 = vmul.f32 1.0, %v288
    %v290 = vsel %vm246, %v289, 1.0
    %v291 = vmul.f32 %v290, %v231
    %v292 = vsub.f32 1.0, %v290
    %294 = vrot.lane.b32.xlu0 %v244, 96
    %v295 = vpop.permute.xlu0 %294
    %v297 = vmul.f32 %v292, %v295
    %v298 = vadd.f32 %v291, %v297
    %v299 = vmul.f32 %v290, %v238
    %300 = vrot.lane.b32.xlu0 %v244, 64
    %v301 = vpop.permute.xlu0 %300
    %v303 = vadd.f32 %v231, %v301
    %v304 = vmul.f32 %v292, %v303
    %v305 = vadd.f32 %v299, %v304
    %v306 = vtanh.pop %v305
    %307 = vst.msk [vmem:[#allocation3 + $0x2] sm:$0x3] %vm240, %v306
    %308 = vst.msk [vmem:[#allocation3 + $0xc] sm:$0x3] %vm242, %v306
    %v309 = vld [vmem:[#allocation2 + $0x4] sm:$0x3]
    %v310 = vld [vmem:[#allocation8 + $0x4] sm:$0x3]
    %vm311 = vcmp.gt.f32.partialorder %v310, 0.0
    %v313 = vsel %vm179, %v306, 0
    %315 = vmatpush.msra.mxu0 0.0
    %316 = vmatpush.msra.mxu0 0.0
    %317 = vmatpush.msra.mxu0 0.0
    %318 = vmatpush.msra.mxu0 0.0
    %319 = vmatpush.msra.mxu0 0.0
    %320 = vmatpush.msra.mxu0 0.0
    %321 = vmatpush.msra.mxu0 0.0
    %322 = vmatpush.msra.mxu0 0.0
    %323 = vmatpush.msra.mxu0 0.0
    %324 = vmatpush.msra.mxu0 0.0
    %325 = vmatpush.msra.mxu0 0.0
    %326 = vmatpush.msra.mxu0 0.0
    %327 = vmatpush.msra.mxu0 %v175
    %328 = vmatpush.msra.mxu0 %v174
    %329 = vmatpush.msra.mxu0 %v173
    %330 = vmatpush.msra.mxu0 %v172
    %331 = vmatmul.f32.gmra.mxu0 %v313
    %v332 = vpop.f32.mrf.mxu0
    %v333 = vadd.f32 0.0, %v332
    %334 = vdwg.mxu0
    %v335 = vadd.f32 %v309, %v333
    %v336 = vxor.u32 %v335, 2147483648
    %v337 = vmul.f32 %v336, 1.442695
    %v338 = vpow.pop %v337
    %v339 = vadd.f32 %v338, 1.0
    %v340 = vrcp.pop %v339
    %v341 = vmul.f32 %v339, %v340
    %v342 = vsub.f32 1.0, %v341
    %v343 = vmul.f32 %v340, %v342
    %v344 = vadd.f32 %v340, %v343
    %vm345 = vweird.f32 %v339
    %vm346 = vweird.f32 %v340
    %vm347 = vmor %vm345, %vm346
    %v348 = vsel %vm347, %v340, %v344
    %v349 = vand.u32 2147483647, %v339
    %vm350 = vcmp.eq.f32.partialorder %v349, 8.507059e+37
    %v351 = vand.u32 %v339, 2147483648
    %v352 = vor.u32 1.1754944e-38, %v351
    %v353 = vsel %vm350, %v352, %v348
    %v354 = vmul.f32 1.0, %v353
    %v355 = vsel %vm311, %v354, 1.0
    %v356 = vmul.f32 %v355, %v298
    %v357 = vsub.f32 1.0, %v355
    %359 = vrot.lane.b32.xlu0 %v309, 96
    %v360 = vpop.permute.xlu0 %359
    %v362 = vmul.f32 %v357, %v360
    %v363 = vadd.f32 %v356, %v362
    %v364 = vmul.f32 %v355, %v305
    %365 = vrot.lane.b32.xlu0 %v309, 64
    %v366 = vpop.permute.xlu0 %365
    %v368 = vadd.f32 %v298, %v366
    %v369 = vmul.f32 %v357, %v368
    %v370 = vadd.f32 %v364, %v369
    %v371 = vtanh.pop %v370
    %372 = vst.msk [vmem:[#allocation3 + $0x4] sm:$0x3] %vm240, %v371
    %373 = vst.msk [vmem:[#allocation3 + $0xa] sm:$0x3] %vm242, %v371
    %v374 = vld [vmem:[#allocation2 + $0x6] sm:$0x3]
    %v375 = vld [vmem:[#allocation8 + $0x6] sm:$0x3]
    %vm376 = vcmp.gt.f32.partialorder %v375, 0.0
    %v378 = vsel %vm179, %v371, 0
    %380 = vmatpush.msra.mxu0 0.0
    %381 = vmatpush.msra.mxu0 0.0
    %382 = vmatpush.msra.mxu0 0.0
    %383 = vmatpush.msra.mxu0 0.0
    %384 = vmatpush.msra.mxu0 0.0
    %385 = vmatpush.msra.mxu0 0.0
    %386 = vmatpush.msra.mxu0 0.0
    %387 = vmatpush.msra.mxu0 0.0
    %388 = vmatpush.msra.mxu0 0.0
    %389 = vmatpush.msra.mxu0 0.0
    %390 = vmatpush.msra.mxu0 0.0
    %391 = vmatpush.msra.mxu0 0.0
    %392 = vmatpush.msra.mxu0 %v175
    %393 = vmatpush.msra.mxu0 %v174
    %394 = vmatpush.msra.mxu0 %v173
    %395 = vmatpush.msra.mxu0 %v172
    %396 = vmatmul.f32.gmra.mxu0 %v378
    %v397 = vpop.f32.mrf.mxu0
    %v398 = vadd.f32 0.0, %v397
    %399 = vdwg.mxu0
    %v400 = vadd.f32 %v374, %v398
    %v401 = vxor.u32 %v400, 2147483648
    %v402 = vmul.f32 %v401, 1.442695
    %v403 = vpow.pop %v402
    %v404 = vadd.f32 %v403, 1.0
    %v405 = vrcp.pop %v404
    %v406 = vmul.f32 %v404, %v405
    %v407 = vsub.f32 1.0, %v406
    %v408 = vmul.f32 %v405, %v407
    %v409 = vadd.f32 %v405, %v408
    %vm410 = vweird.f32 %v404
    %vm411 = vweird.f32 %v405
    %vm412 = vmor %vm410, %vm411
    %v413 = vsel %vm412, %v405, %v409
    %v414 = vand.u32 2147483647, %v404
    %vm415 = vcmp.eq.f32.partialorder %v414, 8.507059e+37
    %v416 = vand.u32 %v404, 2147483648
    %v417 = vor.u32 1.1754944e-38, %v416
    %v418 = vsel %vm415, %v417, %v413
    %v419 = vmul.f32 1.0, %v418
    %v420 = vsel %vm376, %v419, 1.0
    %v421 = vmul.f32 %v420, %v363
    %v422 = vsub.f32 1.0, %v420
    %424 = vrot.lane.b32.xlu0 %v374, 96
    %v425 = vpop.permute.xlu0 %424
    %v427 = vmul.f32 %v422, %v425
    %v428 = vadd.f32 %v421, %v427
    %v429 = vmul.f32 %v420, %v370
    %430 = vrot.lane.b32.xlu0 %v374, 64
    %v431 = vpop.permute.xlu0 %430
    %v433 = vadd.f32 %v363, %v431
    %v434 = vmul.f32 %v422, %v433
    %v435 = vadd.f32 %v429, %v434
    %v436 = vtanh.pop %v435
    %437 = vst.msk [vmem:[#allocation3 + $0x6] sm:$0x3] %vm240, %v436
    %438 = vst.msk [vmem:[#allocation3 + $0x8] sm:$0x3] %vm242, %v436
    %v439 = vld [vmem:[#allocation2 + $0x8] sm:$0x3]
    %v440 = vld [vmem:[#allocation8 + $0x8] sm:$0x3]
    %vm441 = vcmp.gt.f32.partialorder %v440, 0.0
    %v443 = vsel %vm179, %v436, 0
    %445 = vmatpush.msra.mxu0 0.0
    %446 = vmatpush.msra.mxu0 0.0
    %447 = vmatpush.msra.mxu0 0.0
    %448 = vmatpush.msra.mxu0 0.0
    %449 = vmatpush.msra.mxu0 0.0
    %450 = vmatpush.msra.mxu0 0.0
    %451 = vmatpush.msra.mxu0 0.0
    %452 = vmatpush.msra.mxu0 0.0
    %453 = vmatpush.msra.mxu0 0.0
    %454 = vmatpush.msra.mxu0 0.0
    %455 = vmatpush.msra.mxu0 0.0
    %456 = vmatpush.msra.mxu0 0.0
    %457 = vmatpush.msra.mxu0 %v175
    %458 = vmatpush.msra.mxu0 %v174
    %459 = vmatpush.msra.mxu0 %v173
    %460 = vmatpush.msra.mxu0 %v172
    %461 = vmatmul.f32.gmra.mxu0 %v443
    %v462 = vpop.f32.mrf.mxu0
    %v463 = vadd.f32 0.0, %v462
    %464 = vdwg.mxu0
    %v465 = vadd.f32 %v439, %v463
    %v466 = vxor.u32 %v465, 2147483648
    %v467 = vmul.f32 %v466, 1.442695
    %v468 = vpow.pop %v467
    %v469 = vadd.f32 %v468, 1.0
    %v470 = vrcp.pop %v469
    %v471 = vmul.f32 %v469, %v470
    %v472 = vsub.f32 1.0, %v471
    %v473 = vmul.f32 %v470, %v472
    %v474 = vadd.f32 %v470, %v473
    %vm475 = vweird.f32 %v469
    %vm476 = vweird.f32 %v470
    %vm477 = vmor %vm475, %vm476
    %v478 = vsel %vm477, %v470, %v474
    %v479 = vand.u32 2147483647, %v469
    %vm480 = vcmp.eq.f32.partialorder %v479, 8.507059e+37
    %v481 = vand.u32 %v469, 2147483648
    %v482 = vor.u32 1.1754944e-38, %v481
    %v483 = vsel %vm480, %v482, %v478
    %v484 = vmul.f32 1.0, %v483
    %v485 = vsel %vm441, %v484, 1.0
    %v486 = vmul.f32 %v485, %v428
    %v487 = vsub.f32 1.0, %v485
    %489 = vrot.lane.b32.xlu0 %v439, 96
    %v490 = vpop.permute.xlu0 %489
    %v492 = vmul.f32 %v487, %v490
    %v493 = vadd.f32 %v486, %v492
    %v494 = vmul.f32 %v485, %v435
    %495 = vrot.lane.b32.xlu0 %v439, 64
    %v496 = vpop.permute.xlu0 %495
    %v498 = vadd.f32 %v428, %v496
    %v499 = vmul.f32 %v487, %v498
    %v500 = vadd.f32 %v494, %v499
    %v501 = vtanh.pop %v500
    %502 = vst.msk [vmem:[#allocation3 + $0x8] sm:$0x3] %vm240, %v501
    %503 = vst.msk [vmem:[#allocation3 + $0x6] sm:$0x3] %vm242, %v501
    %v504 = vld [vmem:[#allocation2 + $0xa] sm:$0x3]
    %v505 = vld [vmem:[#allocation8 + $0xa] sm:$0x3]
    %vm506 = vcmp.gt.f32.partialorder %v505, 0.0
    %v508 = vsel %vm179, %v501, 0
    %510 = vmatpush.msra.mxu0 0.0
    %511 = vmatpush.msra.mxu0 0.0
    %512 = vmatpush.msra.mxu0 0.0
    %513 = vmatpush.msra.mxu0 0.0
    %514 = vmatpush.msra.mxu0 0.0
    %515 = vmatpush.msra.mxu0 0.0
    %516 = vmatpush.msra.mxu0 0.0
    %517 = vmatpush.msra.mxu0 0.0
    %518 = vmatpush.msra.mxu0 0.0
    %519 = vmatpush.msra.mxu0 0.0
    %520 = vmatpush.msra.mxu0 0.0
    %521 = vmatpush.msra.mxu0 0.0
    %522 = vmatpush.msra.mxu0 %v175
    %523 = vmatpush.msra.mxu0 %v174
    %524 = vmatpush.msra.mxu0 %v173
    %525 = vmatpush.msra.mxu0 %v172
    %526 = vmatmul.f32.gmra.mxu0 %v508
    %v527 = vpop.f32.mrf.mxu0
    %v528 = vadd.f32 0.0, %v527
    %529 = vdwg.mxu0
    %v530 = vadd.f32 %v504, %v528
    %v531 = vxor.u32 %v530, 2147483648
    %v532 = vmul.f32 %v531, 1.442695
    %v533 = vpow.pop %v532
    %v534 = vadd.f32 %v533, 1.0
    %v535 = vrcp.pop %v534
    %v536 = vmul.f32 %v534, %v535
    %v537 = vsub.f32 1.0, %v536
    %v538 = vmul.f32 %v535, %v537
    %v539 = vadd.f32 %v535, %v538
    %vm540 = vweird.f32 %v534
    %vm541 = vweird.f32 %v535
    %vm542 = vmor %vm540, %vm541
    %v543 = vsel %vm542, %v535, %v539
    %v544 = vand.u32 2147483647, %v534
    %vm545 = vcmp.eq.f32.partialorder %v544, 8.507059e+37
    %v546 = vand.u32 %v534, 2147483648
    %v547 = vor.u32 1.1754944e-38, %v546
    %v548 = vsel %vm545, %v547, %v543
    %v549 = vmul.f32 1.0, %v548
    %v550 = vsel %vm506, %v549, 1.0
    %v551 = vmul.f32 %v550, %v493
    %v552 = vsub.f32 1.0, %v550
    %554 = vrot.lane.b32.xlu0 %v504, 96
    %v555 = vpop.permute.xlu0 %554
    %v557 = vmul.f32 %v552, %v555
    %v558 = vadd.f32 %v551, %v557
    %v559 = vmul.f32 %v550, %v500
    %560 = vrot.lane.b32.xlu0 %v504, 64
    %v561 = vpop.permute.xlu0 %560
    %v563 = vadd.f32 %v493, %v561
    %v564 = vmul.f32 %v552, %v563
    %v565 = vadd.f32 %v559, %v564
    %v566 = vtanh.pop %v565
    %567 = vst.msk [vmem:[#allocation3 + $0xa] sm:$0x3] %vm240, %v566
    %568 = vst.msk [vmem:[#allocation3 + $0x4] sm:$0x3] %vm242, %v566
    %v569 = vld [vmem:[#allocation2 + $0xc] sm:$0x3]
    %v570 = vld [vmem:[#allocation8 + $0xc] sm:$0x3]
    %vm571 = vcmp.gt.f32.partialorder %v570, 0.0
    %v573 = vsel %vm179, %v566, 0
    %575 = vmatpush.msra.mxu0 0.0
    %576 = vmatpush.msra.mxu0 0.0
    %577 = vmatpush.msra.mxu0 0.0
    %578 = vmatpush.msra.mxu0 0.0
    %579 = vmatpush.msra.mxu0 0.0
    %580 = vmatpush.msra.mxu0 0.0
    %581 = vmatpush.msra.mxu0 0.0
    %582 = vmatpush.msra.mxu0 0.0
    %583 = vmatpush.msra.mxu0 0.0
    %584 = vmatpush.msra.mxu0 0.0
    %585 = vmatpush.msra.mxu0 0.0
    %586 = vmatpush.msra.mxu0 0.0
    %587 = vmatpush.msra.mxu0 %v175
    %588 = vmatpush.msra.mxu0 %v174
    %589 = vmatpush.msra.mxu0 %v173
    %590 = vmatpush.msra.mxu0 %v172
    %591 = vmatmul.f32.gmra.mxu0 %v573
    %v592 = vpop.f32.mrf.mxu0
    %v593 = vadd.f32 0.0, %v592
    %594 = vdwg.mxu0
    %v595 = vadd.f32 %v569, %v593
    %v596 = vxor.u32 %v595, 2147483648
    %v597 = vmul.f32 %v596, 1.442695
    %v598 = vpow.pop %v597
    %v599 = vadd.f32 %v598, 1.0
    %v600 = vrcp.pop %v599
    %v601 = vmul.f32 %v599, %v600
    %v602 = vsub.f32 1.0, %v601
    %v603 = vmul.f32 %v600, %v602
    %v604 = vadd.f32 %v600, %v603
    %vm605 = vweird.f32 %v599
    %vm606 = vweird.f32 %v600
    %vm607 = vmor %vm605, %vm606
    %v608 = vsel %vm607, %v600, %v604
    %v609 = vand.u32 2147483647, %v599
    %vm610 = vcmp.eq.f32.partialorder %v609, 8.507059e+37
    %v611 = vand.u32 %v599, 2147483648
    %v612 = vor.u32 1.1754944e-38, %v611
    %v613 = vsel %vm610, %v612, %v608
    %v614 = vmul.f32 1.0, %v613
    %v615 = vsel %vm571, %v614, 1.0
    %v616 = vmul.f32 %v615, %v558
    %v617 = vsub.f32 1.0, %v615
    %619 = vrot.lane.b32.xlu0 %v569, 96
    %v620 = vpop.permute.xlu0 %619
    %v622 = vmul.f32 %v617, %v620
    %v623 = vadd.f32 %v616, %v622
    %v624 = vmul.f32 %v615, %v565
    %625 = vrot.lane.b32.xlu0 %v569, 64
    %v626 = vpop.permute.xlu0 %625
    %v628 = vadd.f32 %v558, %v626
    %v629 = vmul.f32 %v617, %v628
    %v630 = vadd.f32 %v624, %v629
    %v631 = vtanh.pop %v630
    %632 = vst.msk [vmem:[#allocation3 + $0xc] sm:$0x3] %vm240, %v631
    %633 = vst.msk [vmem:[#allocation3 + $0x2] sm:$0x3] %vm242, %v631
    %v634 = vld [vmem:[#allocation2 + $0xe] sm:$0x3]
    %v635 = vld [vmem:[#allocation8 + $0xe] sm:$0x3]
    %vm636 = vcmp.gt.f32.partialorder %v635, 0.0
    %v638 = vsel %vm179, %v631, 0
    %640 = vmatpush.msra.mxu0 0.0
    %641 = vmatpush.msra.mxu0 0.0
    %642 = vmatpush.msra.mxu0 0.0
    %643 = vmatpush.msra.mxu0 0.0
    %644 = vmatpush.msra.mxu0 0.0
    %645 = vmatpush.msra.mxu0 0.0
    %646 = vmatpush.msra.mxu0 0.0
    %647 = vmatpush.msra.mxu0 0.0
    %648 = vmatpush.msra.mxu0 0.0
    %649 = vmatpush.msra.mxu0 0.0
    %650 = vmatpush.msra.mxu0 0.0
    %651 = vmatpush.msra.mxu0 0.0
    %652 = vmatpush.msra.mxu0 %v175
    %653 = vmatpush.msra.mxu0 %v174
    %654 = vmatpush.msra.mxu0 %v173
    %655 = vmatpush.msra.mxu0 %v172
    %656 = vmatmul.f32.gmra.mxu0 %v638
    %v657 = vpop.f32.mrf.mxu0
    %v658 = vadd.f32 0.0, %v657
    %659 = vdwg.mxu0
    %v660 = vadd.f32 %v634, %v658
    %v661 = vxor.u32 %v660, 2147483648
    %v662 = vmul.f32 %v661, 1.442695
    %v663 = vpow.pop %v662
    %v664 = vadd.f32 %v663, 1.0
    %v665 = vrcp.pop %v664
    %v666 = vmul.f32 %v664, %v665
    %v667 = vsub.f32 1.0, %v666
    %v668 = vmul.f32 %v665, %v667
    %v669 = vadd.f32 %v665, %v668
    %vm670 = vweird.f32 %v664
    %vm671 = vweird.f32 %v665
    %vm672 = vmor %vm670, %vm671
    %v673 = vsel %vm672, %v665, %v669
    %v674 = vand.u32 2147483647, %v664
    %vm675 = vcmp.eq.f32.partialorder %v674, 8.507059e+37
    %v676 = vand.u32 %v664, 2147483648
    %v677 = vor.u32 1.1754944e-38, %v676
    %v678 = vsel %vm675, %v677, %v673
    %v679 = vmul.f32 1.0, %v678
    %v680 = vsel %vm636, %v679, 1.0
    %v681 = vmul.f32 %v680, %v630
    %v682 = vsub.f32 1.0, %v680
    %684 = vrot.lane.b32.xlu0 %v634, 64
    %v685 = vpop.permute.xlu0 %684
    %v687 = vadd.f32 %v623, %v685
    %v688 = vmul.f32 %v682, %v687
    %v689 = vadd.f32 %v681, %v688
    %v690 = vtanh.pop %v689
    %691 = vst.msk [vmem:[#allocation3 + $0xe] sm:$0x3] %vm240, %v690
    %692 = vst.msk [vmem:[#allocation3] sm:$0x3] %vm242, %v690
    %v693 = vld [vmem:[#allocation3] sm:$0xff]
    %v694 = vld [vmem:[#allocation3 + $0x8] sm:$0xff]
    %v695 = vld [vmem:[#allocation13] sm:$0xff]
    %v696 = vld [vmem:[#allocation13 + $0x8] sm:$0xff]
    %v697 = vld [vmem:[#allocation13 + $0x10] sm:$0xff]
    %v698 = vld [vmem:[#allocation13 + $0x18] sm:$0xff]
    %v699 = vld [vmem:[%s6] sm:$0x1]
    %v701 = vperm.slane %v699, 0
    %v704 = vsel %vm179, %v693, 0
    %v707 = vsel %vm179, %v694, 0
    %709 = vmatpush.msra.mxu0 0.0
    %710 = vmatpush.msra.mxu0 0.0
    %711 = vmatpush.msra.mxu0 0.0
    %712 = vmatpush.msra.mxu0 0.0
    %713 = vmatpush.msra.mxu0 0.0
    %714 = vmatpush.msra.mxu0 0.0
    %715 = vmatpush.msra.mxu0 0.0
    %716 = vmatpush.msra.mxu0 0.0
    %717 = vmatpush.msra.mxu0 0.0
    %718 = vmatpush.msra.mxu0 0.0
    %719 = vmatpush.msra.mxu0 0.0
    %720 = vmatpush.msra.mxu0 0.0
    %721 = vmatpush.msra.mxu0 %v698
    %722 = vmatpush.msra.mxu0 %v697
    %723 = vmatpush.msra.mxu0 %v696
    %724 = vmatpush.msra.mxu0 %v695
    %725 = vmatmul.f32.gmra.mxu0 %v704
    %v726 = vpop.f32.mrf.mxu0
    %v727 = vadd.f32 %v701, %v726
    %728 = vmatmul.f32.gmra.mxu0 %v707
    %v729 = vpop.f32.mrf.mxu0
    %v730 = vadd.f32 %v701, %v729
    %731 = vdwg.mxu0
    %vm732 = vcmask 203776
    %733 = vst.msk [vmem:[#allocation4] sm:$0xff] %vm732, %v727
    %734 = vst.msk [vmem:[#allocation4 + $0x8] sm:$0xff] %vm732, %v730
    %v735 = vld [vmem:[#allocation14] sm:$0xff]
    %v736 = vld [vmem:[%s8] sm:$0x1]
    %v737 = vld [vmem:[#allocation4] sm:$0x3]
    %vm738 = vcmask 64512
    %v739 = vsel %vm738, 0.0, 0
    %741 = vmatpush.msra.mxu0 0.0
    %742 = vmatpush.msra.mxu0 0.0
    %743 = vmatpush.msra.mxu0 0.0
    %744 = vmatpush.msra.mxu0 0.0
    %745 = vmatpush.msra.mxu0 0.0
    %746 = vmatpush.msra.mxu0 0.0
    %747 = vmatpush.msra.mxu0 0.0
    %748 = vmatpush.msra.mxu0 0.0
    %749 = vmatpush.msra.mxu0 0.0
    %750 = vmatpush.msra.mxu0 0.0
    %751 = vmatpush.msra.mxu0 0.0
    %752 = vmatpush.msra.mxu0 0.0
    %753 = vmatpush.msra.mxu0 0.0
    %754 = vmatpush.msra.mxu0 0.0
    %755 = vmatpush.msra.mxu0 0.0
    %756 = vmatpush.msra.mxu0 %v735
    %757 = vmatmul.f32.gmra.mxu0 %v739
    %v758 = vpop.f32.mrf.mxu0
    %v759 = vadd.f32 0.0, %v758
    %760 = vdwg.mxu0
    %762 = vrot.lane.b32.xlu0 %v759, 16
    %v763 = vpop.permute.xlu0 %762
    %v765 = vadd.f32 %v737, %v763
    %vm766 = vcmp.ge.f32.partialorder %v765, 0.0
    %v767 = vsel %vm766, 1, 0
    %v768 = vcvt.s32.f32 %v767
    %v769 = vld [vmem:[#allocation8] sm:$0x3]
    %771 = vrot.lane.b32.xlu0 %v769, 24
    %v772 = vpop.permute.xlu0 %771
    %v774 = vmul.f32 %v768, %v772
    %776 = vrot.lane.b32.xlu0 %v774, 104
    %v777 = vpop.permute.xlu0 %776
    %vm779 = vcmask 1024
    %780 = vst.msk [vmem:[#allocation16] sm:$0x3] %vm779, %v777
    %782 = vset.pattern.permute.xlu0 24
    %783 = vperm.xlu0 %782, %v768
    %v784 = vpop.permute.xlu0 %783
    %v787 = vperm.slane %v736, 0
    %v789 = vmul.f32 %v784, %v787
    %v790 = vadd.f32 %v737, %v789
    %v791 = vadd.f32 %v790, %v759
    %v792 = vxor.u32 %v791, 2147483648
    %v793 = vmul.f32 %v792, 1.442695
    %v794 = vpow.pop %v793
    %v795 = vadd.f32 %v794, 1.0
    %v796 = vrcp.pop %v795
    %v797 = vmul.f32 %v795, %v796
    %v798 = vsub.f32 1.0, %v797
    %v799 = vmul.f32 %v796, %v798
    %v800 = vadd.f32 %v796, %v799
    %vm801 = vweird.f32 %v795
    %vm802 = vweird.f32 %v796
    %vm803 = vmor %vm801, %vm802
    %v804 = vsel %vm803, %v796, %v800
    %v805 = vand.u32 2147483647, %v795
    %vm806 = vcmp.eq.f32.partialorder %v805, 8.507059e+37
    %v807 = vand.u32 %v795, 2147483648
    %v808 = vor.u32 1.1754944e-38, %v807
    %v809 = vsel %vm806, %v808, %v804
    %v810 = vmul.f32 1.0, %v809
    %v811 = vmul.f32 %v810, 0.0
    %v812 = vsub.f32 1.0, %v810
    %814 = vrot.lane.b32.xlu0 %v790, 120
    %v815 = vpop.permute.xlu0 %814
    %v817 = vmul.f32 %v812, %v815
    %v818 = vadd.f32 %v811, %v817
    %v819 = vadd.f32 %v790, 0.0
    %821 = vrot.lane.b32.xlu0 %v819, 112
    %v822 = vpop.permute.xlu0 %821
    %v824 = vmul.f32 %v812, %v822
    %v825 = vadd.f32 %v811, %v824
    %v826 = vtanh.pop %v825
    %v827 = vld [vmem:[#allocation4 + $0x2] sm:$0x3]
    %v829 = vsel %vm738, %v826, 0
    %831 = vmatpush.msra.mxu0 0.0
    %832 = vmatpush.msra.mxu0 0.0
    %833 = vmatpush.msra.mxu0 0.0
    %834 = vmatpush.msra.mxu0 0.0
    %835 = vmatpush.msra.mxu0 0.0
    %836 = vmatpush.msra.mxu0 0.0
    %837 = vmatpush.msra.mxu0 0.0
    %838 = vmatpush.msra.mxu0 0.0
    %839 = vmatpush.msra.mxu0 0.0
    %840 = vmatpush.msra.mxu0 0.0
    %841 = vmatpush.msra.mxu0 0.0
    %842 = vmatpush.msra.mxu0 0.0
    %843 = vmatpush.msra.mxu0 0.0
    %844 = vmatpush.msra.mxu0 0.0
    %845 = vmatpush.msra.mxu0 0.0
    %846 = vmatpush.msra.mxu0 %v735
    %847 = vmatmul.f32.gmra.mxu0 %v829
    %v848 = vpop.f32.mrf.mxu0
    %v849 = vadd.f32 0.0, %v848
    %850 = vdwg.mxu0
    %852 = vrot.lane.b32.xlu0 %v849, 16
    %v853 = vpop.permute.xlu0 %852
    %v855 = vadd.f32 %v827, %v853
    %vm856 = vcmp.ge.f32.partialorder %v855, 0.0
    %v857 = vsel %vm856, 1, 0
    %v858 = vcvt.s32.f32 %v857
    %v859 = vld [vmem:[#allocation8 + $0x2] sm:$0x3]
    %861 = vrot.lane.b32.xlu0 %v859, 24
    %v862 = vpop.permute.xlu0 %861
    %v864 = vmul.f32 %v858, %v862
    %866 = vrot.lane.b32.xlu0 %v864, 105
    %v867 = vpop.permute.xlu0 %866
    %vm869 = vcmask 9224
    %870 = vst.msk [vmem:[#allocation16] sm:$0x3] %vm869, %v867
    %872 = vset.pattern.permute.xlu0 24
    %873 = vperm.xlu0 %872, %v858
    %v874 = vpop.permute.xlu0 %873
    %v876 = vmul.f32 %v874, %v787
    %v877 = vadd.f32 %v827, %v876
    %v878 = vadd.f32 %v877, %v849
    %v879 = vxor.u32 %v878, 2147483648
    %v880 = vmul.f32 %v879, 1.442695
    %v881 = vpow.pop %v880
    %v882 = vadd.f32 %v881, 1.0
    %v883 = vrcp.pop %v882
    %v884 = vmul.f32 %v882, %v883
    %v885 = vsub.f32 1.0, %v884
    %v886 = vmul.f32 %v883, %v885
    %v887 = vadd.f32 %v883, %v886
    %vm888 = vweird.f32 %v882
    %vm889 = vweird.f32 %v883
    %vm890 = vmor %vm888, %vm889
    %v891 = vsel %vm890, %v883, %v887
    %v892 = vand.u32 2147483647, %v882
    %vm893 = vcmp.eq.f32.partialorder %v892, 8.507059e+37
    %v894 = vand.u32 %v882, 2147483648
    %v895 = vor.u32 1.1754944e-38, %v894
    %v896 = vsel %vm893, %v895, %v891
    %v897 = vmul.f32 1.0, %v896
    %v898 = vmul.f32 %v897, %v818
    %v899 = vsub.f32 1.0, %v897
    %901 = vrot.lane.b32.xlu0 %v877, 120
    %v902 = vpop.permute.xlu0 %901
    %v904 = vmul.f32 %v899, %v902
    %v905 = vadd.f32 %v898, %v904
    %v906 = vmul.f32 %v897, %v825
    %907 = vrot.lane.b32.xlu0 %v877, 112
    %v908 = vpop.permute.xlu0 %907
    %v910 = vadd.f32 %v818, %v908
    %v911 = vmul.f32 %v899, %v910
    %v912 = vadd.f32 %v906, %v911
    %v913 = vtanh.pop %v912
    %v914 = vld [vmem:[#allocation4 + $0x4] sm:$0x3]
    %v916 = vsel %vm738, %v913, 0
    %918 = vmatpush.msra.mxu0 0.0
    %919 = vmatpush.msra.mxu0 0.0
    %920 = vmatpush.msra.mxu0 0.0
    %921 = vmatpush.msra.mxu0 0.0
    %922 = vmatpush.msra.mxu0 0.0
    %923 = vmatpush.msra.mxu0 0.0
    %924 = vmatpush.msra.mxu0 0.0
    %925 = vmatpush.msra.mxu0 0.0
    %926 = vmatpush.msra.mxu0 0.0
    %927 = vmatpush.msra.mxu0 0.0
    %928 = vmatpush.msra.mxu0 0.0
    %929 = vmatpush.msra.mxu0 0.0
    %930 = vmatpush.msra.mxu0 0.0
    %931 = vmatpush.msra.mxu0 0.0
    %932 = vmatpush.msra.mxu0 0.0
    %933 = vmatpush.msra.mxu0 %v735
    %934 = vmatmul.f32.gmra.mxu0 %v916
    %v935 = vpop.f32.mrf.mxu0
    %v936 = vadd.f32 0.0, %v935
    %937 = vdwg.mxu0
    %939 = vrot.lane.b32.xlu0 %v936, 16
    %v940 = vpop.permute.xlu0 %939
    %v942 = vadd.f32 %v914, %v940
    %vm943 = vcmp.ge.f32.partialorder %v942, 0.0
    %v944 = vsel %vm943, 1, 0
    %v945 = vcvt.s32.f32 %v944
    %v946 = vld [vmem:[#allocation8 + $0x4] sm:$0x3]
    %948 = vrot.lane.b32.xlu0 %v946, 24
    %v949 = vpop.permute.xlu0 %948
    %v951 = vmul.f32 %v945, %v949
    %953 = vrot.lane.b32.xlu0 %v951, 106
    %v954 = vpop.permute.xlu0 %953
    %vm956 = vcmask 17424
    %957 = vst.msk [vmem:[#allocation16] sm:$0x3] %vm956, %v954
    %959 = vset.pattern.permute.xlu0 24
    %960 = vperm.xlu0 %959, %v945
    %v961 = vpop.permute.xlu0 %960
    %v963 = vmul.f32 %v961, %v787
    %v964 = vadd.f32 %v914, %v963
    %v965 = vadd.f32 %v964, %v936
    %v966 = vxor.u32 %v965, 2147483648
    %v967 = vmul.f32 %v966, 1.442695
    %v968 = vpow.pop %v967
    %v969 = vadd.f32 %v968, 1.0
    %v970 = vrcp.pop %v969
    %v971 = vmul.f32 %v969, %v970
    %v972 = vsub.f32 1.0, %v971
    %v973 = vmul.f32 %v970, %v972
    %v974 = vadd.f32 %v970, %v973
    %vm975 = vweird.f32 %v969
    %vm976 = vweird.f32 %v970
    %vm977 = vmor %vm975, %vm976
    %v978 = vsel %vm977, %v970, %v974
    %v979 = vand.u32 2147483647, %v969
    %vm980 = vcmp.eq.f32.partialorder %v979, 8.507059e+37
    %v981 = vand.u32 %v969, 2147483648
    %v982 = vor.u32 1.1754944e-38, %v981
    %v983 = vsel %vm980, %v982, %v978
    %v984 = vmul.f32 1.0, %v983
    %v985 = vmul.f32 %v984, %v905
    %v986 = vsub.f32 1.0, %v984
    %988 = vrot.lane.b32.xlu0 %v964, 120
    %v989 = vpop.permute.xlu0 %988
    %v991 = vmul.f32 %v986, %v989
    %v992 = vadd.f32 %v985, %v991
    %v993 = vmul.f32 %v984, %v912
    %994 = vrot.lane.b32.xlu0 %v964, 112
    %v995 = vpop.permute.xlu0 %994
    %v997 = vadd.f32 %v905, %v995
    %v998 = vmul.f32 %v986, %v997
    %v999 = vadd.f32 %v993, %v998
    %v1000 = vtanh.pop %v999
    %v1001 = vld [vmem:[#allocation4 + $0x6] sm:$0x3]
    %v1003 = vsel %vm738, %v1000, 0
    %1005 = vmatpush.msra.mxu0 0.0
    %1006 = vmatpush.msra.mxu0 0.0
    %1007 = vmatpush.msra.mxu0 0.0
    %1008 = vmatpush.msra.mxu0 0.0
    %1009 = vmatpush.msra.mxu0 0.0
    %1010 = vmatpush.msra.mxu0 0.0
    %1011 = vmatpush.msra.mxu0 0.0
    %1012 = vmatpush.msra.mxu0 0.0
    %1013 = vmatpush.msra.mxu0 0.0
    %1014 = vmatpush.msra.mxu0 0.0
    %1015 = vmatpush.msra.mxu0 0.0
    %1016 = vmatpush.msra.mxu0 0.0
    %1017 = vmatpush.msra.mxu0 0.0
    %1018 = vmatpush.msra.mxu0 0.0
    %1019 = vmatpush.msra.mxu0 0.0
    %1020 = vmatpush.msra.mxu0 %v735
    %1021 = vmatmul.f32.gmra.mxu0 %v1003
    %v1022 = vpop.f32.mrf.mxu0
    %v1023 = vadd.f32 0.0, %v1022
    %1024 = vdwg.mxu0
    %1026 = vrot.lane.b32.xlu0 %v1023, 16
    %v1027 = vpop.permute.xlu0 %1026
    %v1029 = vadd.f32 %v1001, %v1027
    %vm1030 = vcmp.ge.f32.partialorder %v1029, 0.0
    %v1031 = vsel %vm1030, 1, 0
    %v1032 = vcvt.s32.f32 %v1031
    %v1033 = vld [vmem:[#allocation8 + $0x6] sm:$0x3]
    %1035 = vrot.lane.b32.xlu0 %v1033, 24
    %v1036 = vpop.permute.xlu0 %1035
    %v1038 = vmul.f32 %v1032, %v1036
    %1040 = vrot.lane.b32.xlu0 %v1038, 107
    %v1041 = vpop.permute.xlu0 %1040
    %vm1043 = vcmask 25624
    %1044 = vst.msk [vmem:[#allocation16] sm:$0x3] %vm1043, %v1041
    %1046 = vset.pattern.permute.xlu0 24
    %1047 = vperm.xlu0 %1046, %v1032
    %v1048 = vpop.permute.xlu0 %1047
    %v1050 = vmul.f32 %v1048, %v787
    %v1051 = vadd.f32 %v1001, %v1050
    %v1052 = vadd.f32 %v1051, %v1023
    %v1053 = vxor.u32 %v1052, 2147483648
    %v1054 = vmul.f32 %v1053, 1.442695
    %v1055 = vpow.pop %v1054
    %v1056 = vadd.f32 %v1055, 1.0
    %v1057 = vrcp.pop %v1056
    %v1058 = vmul.f32 %v1056, %v1057
    %v1059 = vsub.f32 1.0, %v1058
    %v1060 = vmul.f32 %v1057, %v1059
    %v1061 = vadd.f32 %v1057, %v1060
    %vm1062 = vweird.f32 %v1056
    %vm1063 = vweird.f32 %v1057
    %vm1064 = vmor %vm1062, %vm1063
    %v1065 = vsel %vm1064, %v1057, %v1061
    %v1066 = vand.u32 2147483647, %v1056
    %vm1067 = vcmp.eq.f32.partialorder %v1066, 8.507059e+37
    %v1068 = vand.u32 %v1056, 2147483648
    %v1069 = vor.u32 1.1754944e-38, %v1068
    %v1070 = vsel %vm1067, %v1069, %v1065
    %v1071 = vmul.f32 1.0, %v1070
    %v1072 = vmul.f32 %v1071, %v992
    %v1073 = vsub.f32 1.0, %v1071
    %1075 = vrot.lane.b32.xlu0 %v1051, 120
    %v1076 = vpop.permute.xlu0 %1075
    %v1078 = vmul.f32 %v1073, %v1076
    %v1079 = vadd.f32 %v1072, %v1078
    %v1080 = vmul.f32 %v1071, %v999
    %1081 = vrot.lane.b32.xlu0 %v1051, 112
    %v1082 = vpop.permute.xlu0 %1081
    %v1084 = vadd.f32 %v992, %v1082
    %v1085 = vmul.f32 %v1073, %v1084
    %v1086 = vadd.f32 %v1080, %v1085
    %v1087 = vtanh.pop %v1086
    %v1088 = vld [vmem:[#allocation4 + $0x8] sm:$0x3]
    %v1090 = vsel %vm738, %v1087, 0
    %1092 = vmatpush.msra.mxu0 0.0
    %1093 = vmatpush.msra.mxu0 0.0
    %1094 = vmatpush.msra.mxu0 0.0
    %1095 = vmatpush.msra.mxu0 0.0
    %1096 = vmatpush.msra.mxu0 0.0
    %1097 = vmatpush.msra.mxu0 0.0
    %1098 = vmatpush.msra.mxu0 0.0
    %1099 = vmatpush.msra.mxu0 0.0
    %1100 = vmatpush.msra.mxu0 0.0
    %1101 = vmatpush.msra.mxu0 0.0
    %1102 = vmatpush.msra.mxu0 0.0
    %1103 = vmatpush.msra.mxu0 0.0
    %1104 = vmatpush.msra.mxu0 0.0
    %1105 = vmatpush.msra.mxu0 0.0
    %1106 = vmatpush.msra.mxu0 0.0
    %1107 = vmatpush.msra.mxu0 %v735
    %1108 = vmatmul.f32.gmra.mxu0 %v1090
    %v1109 = vpop.f32.mrf.mxu0
    %v1110 = vadd.f32 0.0, %v1109
    %1111 = vdwg.mxu0
    %1113 = vrot.lane.b32.xlu0 %v1110, 16
    %v1114 = vpop.permute.xlu0 %1113
    %v1116 = vadd.f32 %v1088, %v1114
    %vm1117 = vcmp.ge.f32.partialorder %v1116, 0.0
    %v1118 = vsel %vm1117, 1, 0
    %v1119 = vcvt.s32.f32 %v1118
    %v1120 = vld [vmem:[#allocation8 + $0x8] sm:$0x3]
    %1122 = vrot.lane.b32.xlu0 %v1120, 24
    %v1123 = vpop.permute.xlu0 %1122
    %v1125 = vmul.f32 %v1119, %v1123
    %1127 = vrot.lane.b32.xlu0 %v1125, 108
    %v1128 = vpop.permute.xlu0 %1127
    %vm1130 = vcmask 33824
    %1131 = vst.msk [vmem:[#allocation16] sm:$0x3] %vm1130, %v1128
    %1133 = vset.pattern.permute.xlu0 24
    %1134 = vperm.xlu0 %1133, %v1119
    %v1135 = vpop.permute.xlu0 %1134
    %v1137 = vmul.f32 %v1135, %v787
    %v1138 = vadd.f32 %v1088, %v1137
    %v1139 = vadd.f32 %v1138, %v1110
    %v1140 = vxor.u32 %v1139, 2147483648
    %v1141 = vmul.f32 %v1140, 1.442695
    %v1142 = vpow.pop %v1141
    %v1143 = vadd.f32 %v1142, 1.0
    %v1144 = vrcp.pop %v1143
    %v1145 = vmul.f32 %v1143, %v1144
    %v1146 = vsub.f32 1.0, %v1145
    %v1147 = vmul.f32 %v1144, %v1146
    %v1148 = vadd.f32 %v1144, %v1147
    %vm1149 = vweird.f32 %v1143
    %vm1150 = vweird.f32 %v1144
    %vm1151 = vmor %vm1149, %vm1150
    %v1152 = vsel %vm1151, %v1144, %v1148
    %v1153 = vand.u32 2147483647, %v1143
    %vm1154 = vcmp.eq.f32.partialorder %v1153, 8.507059e+37
    %v1155 = vand.u32 %v1143, 2147483648
    %v1156 = vor.u32 1.1754944e-38, %v1155
    %v1157 = vsel %vm1154, %v1156, %v1152
    %v1158 = vmul.f32 1.0, %v1157
    %v1159 = vmul.f32 %v1158, %v1079
    %v1160 = vsub.f32 1.0, %v1158
    %1162 = vrot.lane.b32.xlu0 %v1138, 120
    %v1163 = vpop.permute.xlu0 %1162
    %v1165 = vmul.f32 %v1160, %v1163
    %v1166 = vadd.f32 %v1159, %v1165
    %v1167 = vmul.f32 %v1158, %v1086
    %1168 = vrot.lane.b32.xlu0 %v1138, 112
    %v1169 = vpop.permute.xlu0 %1168
    %v1171 = vadd.f32 %v1079, %v1169
    %v1172 = vmul.f32 %v1160, %v1171
    %v1173 = vadd.f32 %v1167, %v1172
    %v1174 = vtanh.pop %v1173
    %v1175 = vld [vmem:[#allocation4 + $0xa] sm:$0x3]
    %v1177 = vsel %vm738, %v1174, 0
    %1179 = vmatpush.msra.mxu0 0.0
    %1180 = vmatpush.msra.mxu0 0.0
    %1181 = vmatpush.msra.mxu0 0.0
    %1182 = vmatpush.msra.mxu0 0.0
    %1183 = vmatpush.msra.mxu0 0.0
    %1184 = vmatpush.msra.mxu0 0.0
    %1185 = vmatpush.msra.mxu0 0.0
    %1186 = vmatpush.msra.mxu0 0.0
    %1187 = vmatpush.msra.mxu0 0.0
    %1188 = vmatpush.msra.mxu0 0.0
    %1189 = vmatpush.msra.mxu0 0.0
    %1190 = vmatpush.msra.mxu0 0.0
    %1191 = vmatpush.msra.mxu0 0.0
    %1192 = vmatpush.msra.mxu0 0.0
    %1193 = vmatpush.msra.mxu0 0.0
    %1194 = vmatpush.msra.mxu0 %v735
    %1195 = vmatmul.f32.gmra.mxu0 %v1177
    %v1196 = vpop.f32.mrf.mxu0
    %v1197 = vadd.f32 0.0, %v1196
    %1198 = vdwg.mxu0
    %1200 = vrot.lane.b32.xlu0 %v1197, 16
    %v1201 = vpop.permute.xlu0 %1200
    %v1203 = vadd.f32 %v1175, %v1201
    %vm1204 = vcmp.ge.f32.partialorder %v1203, 0.0
    %v1205 = vsel %vm1204, 1, 0
    %v1206 = vcvt.s32.f32 %v1205
    %v1207 = vld [vmem:[#allocation8 + $0xa] sm:$0x3]
    %1209 = vrot.lane.b32.xlu0 %v1207, 24
    %v1210 = vpop.permute.xlu0 %1209
    %v1212 = vmul.f32 %v1206, %v1210
    %1214 = vrot.lane.b32.xlu0 %v1212, 109
    %v1215 = vpop.permute.xlu0 %1214
    %vm1217 = vcmask 42024
    %1218 = vst.msk [vmem:[#allocation16] sm:$0x3] %vm1217, %v1215
    %1220 = vset.pattern.permute.xlu0 24
    %1221 = vperm.xlu0 %1220, %v1206
    %v1222 = vpop.permute.xlu0 %1221
    %v1224 = vmul.f32 %v1222, %v787
    %v1225 = vadd.f32 %v1175, %v1224
    %v1226 = vadd.f32 %v1225, %v1197
    %v1227 = vxor.u32 %v1226, 2147483648
    %v1228 = vmul.f32 %v1227, 1.442695
    %v1229 = vpow.pop %v1228
    %v1230 = vadd.f32 %v1229, 1.0
    %v1231 = vrcp.pop %v1230
    %v1232 = vmul.f32 %v1230, %v1231
    %v1233 = vsub.f32 1.0, %v1232
    %v1234 = vmul.f32 %v1231, %v1233
    %v1235 = vadd.f32 %v1231, %v1234
    %vm1236 = vweird.f32 %v1230
    %vm1237 = vweird.f32 %v1231
    %vm1238 = vmor %vm1236, %vm1237
    %v1239 = vsel %vm1238, %v1231, %v1235
    %v1240 = vand.u32 2147483647, %v1230
    %vm1241 = vcmp.eq.f32.partialorder %v1240, 8.507059e+37
    %v1242 = vand.u32 %v1230, 2147483648
    %v1243 = vor.u32 1.1754944e-38, %v1242
    %v1244 = vsel %vm1241, %v1243, %v1239
    %v1245 = vmul.f32 1.0, %v1244
    %v1246 = vmul.f32 %v1245, %v1166
    %v1247 = vsub.f32 1.0, %v1245
    %1249 = vrot.lane.b32.xlu0 %v1225, 120
    %v1250 = vpop.permute.xlu0 %1249
    %v1252 = vmul.f32 %v1247, %v1250
    %v1253 = vadd.f32 %v1246, %v1252
    %v1254 = vmul.f32 %v1245, %v1173
    %1255 = vrot.lane.b32.xlu0 %v1225, 112
    %v1256 = vpop.permute.xlu0 %1255
    %v1258 = vadd.f32 %v1166, %v1256
    %v1259 = vmul.f32 %v1247, %v1258
    %v1260 = vadd.f32 %v1254, %v1259
    %v1261 = vtanh.pop %v1260
    %v1262 = vld [vmem:[#allocation4 + $0xc] sm:$0x3]
    %v1264 = vsel %vm738, %v1261, 0
    %1266 = vmatpush.msra.mxu0 0.0
    %1267 = vmatpush.msra.mxu0 0.0
    %1268 = vmatpush.msra.mxu0 0.0
    %1269 = vmatpush.msra.mxu0 0.0
    %1270 = vmatpush.msra.mxu0 0.0
    %1271 = vmatpush.msra.mxu0 0.0
    %1272 = vmatpush.msra.mxu0 0.0
    %1273 = vmatpush.msra.mxu0 0.0
    %1274 = vmatpush.msra.mxu0 0.0
    %1275 = vmatpush.msra.mxu0 0.0
    %1276 = vmatpush.msra.mxu0 0.0
    %1277 = vmatpush.msra.mxu0 0.0
    %1278 = vmatpush.msra.mxu0 0.0
    %1279 = vmatpush.msra.mxu0 0.0
    %1280 = vmatpush.msra.mxu0 0.0
    %1281 = vmatpush.msra.mxu0 %v735
    %1282 = vmatmul.f32.gmra.mxu0 %v1264
    %v1283 = vpop.f32.mrf.mxu0
    %v1284 = vadd.f32 0.0, %v1283
    %1285 = vdwg.mxu0
    %1287 = vrot.lane.b32.xlu0 %v1284, 16
    %v1288 = vpop.permute.xlu0 %1287
    %v1290 = vadd.f32 %v1262, %v1288
    %vm1291 = vcmp.ge.f32.partialorder %v1290, 0.0
    %v1292 = vsel %vm1291, 1, 0
    %v1293 = vcvt.s32.f32 %v1292
    %v1294 = vld [vmem:[#allocation8 + $0xc] sm:$0x3]
    %1296 = vrot.lane.b32.xlu0 %v1294, 24
    %v1297 = vpop.permute.xlu0 %1296
    %v1299 = vmul.f32 %v1293, %v1297
    %1301 = vrot.lane.b32.xlu0 %v1299, 110
    %v1302 = vpop.permute.xlu0 %1301
    %vm1304 = vcmask 50224
    %1305 = vst.msk [vmem:[#allocation16] sm:$0x3] %vm1304, %v1302
    %1307 = vset.pattern.permute.xlu0 24
    %1308 = vperm.xlu0 %1307, %v1293
    %v1309 = vpop.permute.xlu0 %1308
    %v1311 = vmul.f32 %v1309, %v787
    %v1312 = vadd.f32 %v1262, %v1311
    %v1313 = vadd.f32 %v1312, %v1284
    %v1314 = vxor.u32 %v1313, 2147483648
    %v1315 = vmul.f32 %v1314, 1.442695
    %v1316 = vpow.pop %v1315
    %v1317 = vadd.f32 %v1316, 1.0
    %v1318 = vrcp.pop %v1317
    %v1319 = vmul.f32 %v1317, %v1318
    %v1320 = vsub.f32 1.0, %v1319
    %v1321 = vmul.f32 %v1318, %v1320
    %v1322 = vadd.f32 %v1318, %v1321
    %vm1323 = vweird.f32 %v1317
    %vm1324 = vweird.f32 %v1318
    %vm1325 = vmor %vm1323, %vm1324
    %v1326 = vsel %vm1325, %v1318, %v1322
    %v1327 = vand.u32 2147483647, %v1317
    %vm1328 = vcmp.eq.f32.partialorder %v1327, 8.507059e+37
    %v1329 = vand.u32 %v1317, 2147483648
    %v1330 = vor.u32 1.1754944e-38, %v1329
    %v1331 = vsel %vm1328, %v1330, %v1326
    %v1332 = vmul.f32 1.0, %v1331
    %v1333 = vmul.f32 %v1332, %v1260
    %v1334 = vsub.f32 1.0, %v1332
    %1336 = vrot.lane.b32.xlu0 %v1312, 112
    %v1337 = vpop.permute.xlu0 %1336
    %v1339 = vadd.f32 %v1253, %v1337
    %v1340 = vmul.f32 %v1334, %v1339
    %v1341 = vadd.f32 %v1333, %v1340
    %v1342 = vtanh.pop %v1341
    %v1343 = vld [vmem:[#allocation4 + $0xe] sm:$0x3]
    %v1345 = vsel %vm738, %v1342, 0
    %1347 = vmatpush.msra.mxu0 0.0
    %1348 = vmatpush.msra.mxu0 0.0
    %1349 = vmatpush.msra.mxu0 0.0
    %1350 = vmatpush.msra.mxu0 0.0
    %1351 = vmatpush.msra.mxu0 0.0
    %1352 = vmatpush.msra.mxu0 0.0
    %1353 = vmatpush.msra.mxu0 0.0
    %1354 = vmatpush.msra.mxu0 0.0
    %1355 = vmatpush.msra.mxu0 0.0
    %1356 = vmatpush.msra.mxu0 0.0
    %1357 = vmatpush.msra.mxu0 0.0
    %1358 = vmatpush.msra.mxu0 0.0
    %1359 = vmatpush.msra.mxu0 0.0
    %1360 = vmatpush.msra.mxu0 0.0
    %1361 = vmatpush.msra.mxu0 0.0
    %1362 = vmatpush.msra.mxu0 %v735
    %1363 = vmatmul.f32.gmra.mxu0 %v1345
    %v1364 = vpop.f32.mrf.mxu0
    %v1365 = vadd.f32 0.0, %v1364
    %1366 = vdwg.mxu0
    %1368 = vrot.lane.b32.xlu0 %v1365, 16
    %v1369 = vpop.permute.xlu0 %1368
    %v1371 = vadd.f32 %v1343, %v1369
    %vm1372 = vcmp.ge.f32.partialorder %v1371, 0.0
    %v1373 = vsel %vm1372, 1, 0
    %v1374 = vcvt.s32.f32 %v1373
    %v1375 = vld [vmem:[#allocation8 + $0xe] sm:$0x3]
    %1377 = vrot.lane.b32.xlu0 %v1375, 24
    %v1378 = vpop.permute.xlu0 %1377
    %v1380 = vmul.f32 %v1374, %v1378
    %1382 = vrot.lane.b32.xlu0 %v1380, 111
    %v1383 = vpop.permute.xlu0 %1382
    %vm1385 = vcmask 58424
    %1386 = vst.msk [vmem:[#allocation16] sm:$0x3] %vm1385, %v1383
    // Predicated region
    $region62: #{tpu_custom_call.1} parent=1 // pred_check
      _
    $region63: #{tpu_custom_call.1} parent=1 // pred_check_branch
      %1388 = sbr.rel (0) target = $region65
    $region64: #{tpu_custom_call.1} parent=1 // pred_region
      %1390 = vsyncadd [#allocation7], 0
      %s1392 = sshll.u32 [#allocation16], 4
      %s1393 = int_to_ptr.vmem [resolvable:$true] %s1392
      %s1394 = sshll.u32 %s9, 4
      %s1395 = int_to_ptr.hbm [resolvable:$true] %s1394
      %1397 = dma.vmem_to_hbm [thread:$0]  %s1393, 32, %s1395, [#allocation7]
    $region65: #{tpu_custom_call.1} parent=1 // pred_fallthru
      _
    // Predicated region
    $region66: #{tpu_custom_call.1} parent=1 // pred_check
      _
    $region67: #{tpu_custom_call.1} parent=1 // pred_check_branch
      %1399 = sbr.rel (0) target = $region69
    $region68: #{tpu_custom_call.1} parent=1 // pred_region
      %1401 = dma.done [#allocation7], 32
    $region69: #{tpu_custom_call.1} parent=1 // pred_fallthru
      _
    %1402 = vsyncpa [#allocation6], 1
    %1403 = vsyncpa [#allocation9], 1
    %1404 = vsyncpa [#allocation12], 1
    %1405 = vsyncpa [#allocation15], 1
    %1406 = vsyncpa [#allocation7], 1

</llo_original>
